<compile_context>
chip_gen: v6e
topology: v6e:2x2x1
jax: 0.10.0
libtpu: 0.0.40
codegen_flags: <defaults>
</compile_context>

<pallas_src>
import functools

import numpy as np

import jax
import jax.numpy as jnp
from jax.experimental import pallas as pl
from jax.experimental.pallas import tpu as pltpu


LEAKY_SLOPE = 0.2


def _rpad8(n):
    """Row counts padded to a multiple of 8 sublanes (and >= 8)."""
    return max(8, ((n + 7) // 8) * 8)


# ---------------------------------------------------------------------------
# Host-side constant builders.
# Activation layout convention:  A[n*H + h, w*C + c]  (pad rows at the end).
# ---------------------------------------------------------------------------
def _conv_T_concat(w, Hin, Win, stride, pad):
    """PyTorch Conv2d (OIHW, zero pad) -> per-kh banded matrices, lane-concat.

    Returns T of shape (Win*Cin, KH*Wo*Cout) such that the kh-th lane block of
    Z = A @ T is the tap-kh partial conv evaluated at every input row h.
    """
    w = np.asarray(w, np.float32)
    Cout, Cin, KH, KW = w.shape
    Wo = (Win + 2 * pad - KW) // stride + 1
    T = np.zeros((KH, Win * Cin, Wo * Cout), np.float32)
    for kh in range(KH):
        for wo in range(Wo):
            for kw in range(KW):
                w_in = wo * stride - pad + kw
                if 0 <= w_in < Win:
                    T[kh, w_in * Cin:(w_in + 1) * Cin,
                      wo * Cout:(wo + 1) * Cout] = w[:, :, kh, kw].T
    return np.concatenate(list(T), axis=1), Wo, Cout


class _Pack:
    """Packs many small 2D matrices into one tall array (8-aligned row offsets)."""

    def __init__(self):
        self._mats = []
        self.rows = 0

    def add(self, m):
        m = np.asarray(m, np.float32)
        off = self.rows
        self._mats.append((off, m))
        self.rows += _rpad8(m.shape[0])
        return off

    def finalize(self):
        width = max(m.shape[1] for _, m in self._mats)
        out = np.zeros((self.rows, width), np.float32)
        for off, m in self._mats:
            out[off:off + m.shape[0], :m.shape[1]] = m
        return out


def build_plan(params, N, H, W):
    """Builds the packed constants + static per-layer metadata (the plan)."""
    pk = _Pack()
    biases = []

    def add_bias(b, Wo):
        biases.append(np.tile(np.asarray(b, np.float32), Wo))
        return len(biases) - 1

    def enc_meta(w, b, hwc):
        w = np.asarray(w, np.float32)
        Cout, Cin, KH, KW = w.shape
        Hin, Win, C = hwc
        assert C == Cin and KH == 4 and KW == 4
        assert Hin % 2 == 0 and (Hin & (Hin - 1)) == 0
        stride, pad = 2, 1
        Tc, Wo, _ = _conv_T_concat(w, Hin, Win, stride, pad)
        Ho = (Hin + 2 * pad - KH) // stride + 1
        Rin, Rout = _rpad8(N * Hin), _rpad8(N * Ho)
        # S_even: for output row ho of each sample, select input row h = 2*ho.
        S = np.zeros((Rout, Rin), np.float32)
        for n in range(N):
            for ho in range(Ho):
                S[n * Ho + ho, n * Hin + 2 * ho] = 1.0
        m = dict(t_off=pk.add(Tc), t_rows=Win * Cin,
                 s_off=pk.add(S),
                 woc=Wo * Cout, Hin=Hin, Rin=Rin, Rout=Rout,
                 b_idx=add_bias(b, Wo))
        return m, (Ho, Wo, Cout)

    def conv_meta(w, b, hwc):
        w = np.asarray(w, np.float32)
        Cout, Cin, KH, KW = w.shape
        Hc, Wc, C = hwc
        assert C == Cin and KH == 3 and KW == 3
        assert (Hc & (Hc - 1)) == 0
        Tc, Wo, _ = _conv_T_concat(w, Hc, Wc, 1, 1)
        assert Wo == Wc
        m = dict(t_off=pk.add(Tc), t_rows=Wc * Cin,
                 woc=Wc * Cout, H=Hc, R=_rpad8(N * Hc),
                 b_idx=add_bias(b, Wc))
        return m, (Hc, Wc, Cout)

    def upcat_meta(w, b, prev_hwc, skip_hwc):
        w = np.asarray(w, np.float32)
        Cout, Cin, KH, KW = w.shape
        Hp, Wp, Cd = prev_hwc
        Hs, Ws, Cs = skip_hwc
        assert (Hs, Ws) == (2 * Hp, 2 * Wp) and Cin == Cd + Cs
        assert KH == 3 and KW == 3
        Hc, Wc = Hs, Ws
        assert (Hc & (Hc - 1)) == 0
        Tc, Wo, _ = _conv_T_concat(w, Hc, Wc, 1, 1)
        # 2x NN column upsample (Wp*Cd -> Wc*Cd), 0/1 duplication.
        Ucol = np.zeros((Wp * Cd, Wc * Cd), np.float32)
        for w2 in range(Wc):
            for c in range(Cd):
                Ucol[(w2 // 2) * Cd + c, w2 * Cd + c] = 1.0
        # Channel concat [up | skip] -> Wc*(Cd+Cs), 0/1 placement.
        Pa = np.zeros((Wc * Cd, Wc * Cin), np.float32)
        Pb = np.zeros((Wc * Cs, Wc * Cin), np.float32)
        for ww in range(Wc):
            Pa[ww * Cd:(ww + 1) * Cd, ww * Cin:ww * Cin + Cd] = np.eye(Cd, dtype=np.float32)
            Pb[ww * Cs:(ww + 1) * Cs, ww * Cin + Cd:(ww + 1) * Cin] = np.eye(Cs, dtype=np.float32)
        Ta = Ucol @ Pa @ Tc          # pure selection of Tc entries -> bf16 exact fold
        Tb = Pb @ Tc
        # 2x NN row upsample with per-sample block structure (0/1 duplication).
        Rprev, R = _rpad8(N * Hp), _rpad8(N * Hc)
        Urow = np.zeros((R, Rprev), np.float32)
        for n in range(N):
            for h2 in range(Hc):
                Urow[n * Hc + h2, n * Hp + h2 // 2] = 1.0
        m = dict(u_off=pk.add(Urow), R=R, Rprev=Rprev,
                 ta_off=pk.add(Ta), ta_rows=Wp * Cd,
                 tb_off=pk.add(Tb), tb_rows=Wc * Cs,
                 woc=Wc * Cout, H=Hc,
                 b_idx=add_bias(b, Wc))
        return m, (Hc, Wc, Cout)

    plan = {}
    hwc = (H, W, 2)                       # cat([src, tgt], channel dim)
    skip_hwcs = [hwc]
    enc_metas = []
    for wb in params["enc"]:              # encoder: k=4, s=2, p=1
        m, hwc = enc_meta(*wb, hwc)
        enc_metas.append(m)
        skip_hwcs.append(hwc)
    plan["enc"] = enc_metas

    cur = skip_hwcs[-1]
    plan["dec0"], cur = conv_meta(*params["dec"][0], cur)
    plan["up1"], cur = upcat_meta(*params["dec"][1], cur, skip_hwcs[3])  # + enc2
    plan["up2"], cur = upcat_meta(*params["dec"][2], cur, skip_hwcs[2])  # + enc1
    plan["up3"], cur = upcat_meta(*params["dec"][3], cur, skip_hwcs[1])  # + enc0
    plan["dec4"], cur = conv_meta(*params["dec"][4], cur)
    plan["up4"], cur = upcat_meta(*params["dec"][5], cur, skip_hwcs[0])  # + input
    plan["vm2"], cur = conv_meta(*params["vm2"], cur)
    plan["flow"], cur = conv_meta(*params["flow"], cur)

    bias_w = max(len(b) for b in biases)
    bias_pack = np.zeros((len(biases), bias_w), np.float32)
    for i, b in enumerate(biases):
        bias_pack[i, :len(b)] = b

    return plan, pk.finalize(), bias_pack, cur


# ---------------------------------------------------------------------------
# The single fused Pallas kernel: the whole U-Net forward.
# ---------------------------------------------------------------------------
def _unet_kernel(x_ref, mat_ref, bias_ref, out_ref, *, plan):
    f32, bf16 = jnp.float32, jnp.bfloat16

    def mat(off, rows, cols):
        return mat_ref[pl.ds(off, rows), pl.ds(0, cols)]          # bf16

    def bias(idx, cols):
        return bias_ref[pl.ds(idx, 1), pl.ds(0, cols)]            # f32 (1, cols)

    def mm(a, b):
        return jnp.dot(a, b, preferred_element_type=f32)

    def leaky(acc):
        return jnp.maximum(acc, LEAKY_SLOPE * acc)

    def rshift(z, k):
        # rows shifted down by k: result[r] = z[(r - k) % R]   (XLU sublane roll)
        return pltpu.roll(z, k % z.shape[0], axis=0)

    def sample_row_idx(shape, Hc):
        # within-sample row index h of each packed row (Hc is a power of two)
        rows = jax.lax.broadcasted_iota(jnp.int32, shape, 0)
        return jnp.bitwise_and(rows, Hc - 1)

    def fold_rows_s1(z, m):
        """stride-1/pad-1/KH=3 row fold via rolls + per-sample boundary masks."""
        woc, Hc = m["woc"], m["H"]
        z0, z1, z2 = z[:, 0:woc], z[:, woc:2 * woc], z[:, 2 * woc:3 * woc]
        if Hc == 1:
            return z1                       # only the centre tap is in range
        h = sample_row_idx(z1.shape, Hc)
        acc = z1
        acc = acc + jnp.where(h >= 1, rshift(z0, 1), 0.0)        # tap kh=0 (h-1)
        acc = acc + jnp.where(h <= Hc - 2, rshift(z2, -1), 0.0)  # tap kh=2 (h+1)
        return acc

    def conv_s1(x_b, m, activate=True):
        z = mm(x_b, mat(m["t_off"], m["t_rows"], 3 * m["woc"]))
        acc = fold_rows_s1(z, m) + bias(m["b_idx"], m["woc"])
        if not activate:
            return acc                       # flow conv: no activation (bn=None)
        return leaky(acc).astype(bf16)

    def conv_enc(x_b, m):
        """k=4 / stride=2 / pad=1 conv: one T matmul + one even-row-select matmul."""
        woc, Hin, Rin = m["woc"], m["Hin"], m["Rin"]
        z = mm(x_b, mat(m["t_off"], m["t_rows"], 4 * woc))
        z0, z1, z2, z3 = (z[:, 0:woc], z[:, woc:2 * woc],
                          z[:, 2 * woc:3 * woc], z[:, 3 * woc:4 * woc])
        if Hin > 2:
            h = sample_row_idx(z1.shape, Hin)
            # even input rows h=2*ho carry taps kh=1 (row h) and kh=3 (row h+2)
            a = z1 + jnp.where(h <= Hin - 3, rshift(z3, -2), 0.0)
            # odd input rows h=2*ho+1 carry taps kh=2 (row h) and kh=0 (row h-2)
            b = z2 + jnp.where(h >= 2, rshift(z0, 2), 0.0)
        else:                                # Hin == 2: only kh=1,2 in range
            a, b = z1, z2
        ab = (a + rshift(b, -1)).astype(bf16)          # even rows now hold all 4 taps
        acc = mm(mat(m["s_off"], m["Rout"], Rin), ab) + bias(m["b_idx"], woc)
        return leaky(acc).astype(bf16)

    def conv_upcat(y_b, skip_b, m):
        """2x NN upsample + channel concat + k3/s1/p1 conv (concat folded into T)."""
        u = mm(mat(m["u_off"], m["R"], m["Rprev"]), y_b).astype(bf16)  # row upsample
        width = 3 * m["woc"]
        z = (mm(u, mat(m["ta_off"], m["ta_rows"], width)) +
             mm(skip_b, mat(m["tb_off"], m["tb_rows"], width)))
        acc = fold_rows_s1(z, m) + bias(m["b_idx"], m["woc"])
        return leaky(acc).astype(bf16)

    # ---- forward ----
    h = x_ref[...]
    skips = []
    for m in plan["enc"]:
        h = conv_enc(h, m)
        skips.append(h)

    y = conv_s1(skips[3], plan["dec0"])
    y = conv_upcat(y, skips[2], plan["up1"])
    y = conv_upcat(y, skips[1], plan["up2"])
    y = conv_upcat(y, skips[0], plan["up3"])
    y = conv_s1(y, plan["dec4"])
    y = conv_upcat(y, x_ref[...], plan["up4"])   # re-read the input ref for the skip
    y = conv_s1(y, plan["vm2"])
    flow = conv_s1(y, plan["flow"], activate=False)
    out_ref[...] = flow


# ---------------------------------------------------------------------------
# Wrapper: constants built once; the jitted forward is layout plumbing around
# ONE pallas_call with 3 operands.
# ---------------------------------------------------------------------------
def make_forward(params, N, H, W):
    plan, mat_pack_np, bias_pack_np, out_hwc = build_plan(params, N, H, W)
    oh, ow, oc = out_hwc
    rin, rout = _rpad8(N * H), _rpad8(N * oh)
    mat_pack = jnp.asarray(mat_pack_np, jnp.bfloat16)    # 0/1 mats exact in bf16
    bias_pack = jnp.asarray(bias_pack_np, jnp.float32)
    kernel = functools.partial(_unet_kernel, plan=plan)

    @jax.jit
    def forward(src_nchw, tgt_nchw):
        x = jnp.concatenate([src_nchw, tgt_nchw], axis=1)         # (N, 2, H, W)
        cin = x.shape[1]
        x = jnp.transpose(x, (0, 2, 3, 1)).reshape(N * H, W * cin)
        if rin > N * H:
            x = jnp.pad(x, ((0, rin - N * H), (0, 0)))
        x = x.astype(jnp.bfloat16)
        out2d = pl.pallas_call(
            kernel,
            out_shape=jax.ShapeDtypeStruct((rout, ow * oc), jnp.float32),
            in_specs=[pl.BlockSpec(memory_space=pltpu.MemorySpace.VMEM)] * 3,
            out_specs=pl.BlockSpec(memory_space=pltpu.MemorySpace.VMEM),
        )(x, mat_pack, bias_pack)
        flow = out2d[:N * oh].reshape(N, oh, ow, oc)
        return jnp.transpose(flow, (0, 3, 1, 2))                   # -> NCHW

    return forward


# ---------------------------------------------------------------------------
# Parameter construction (deterministic, synthetic weights)
# ---------------------------------------------------------------------------
def init_params(key, enc_nf, dec_nf, dim=2):
    def conv_p(k, cin, cout, ksize, scale=0.1):
        kw_, kb_ = jax.random.split(k)
        w = jax.random.normal(kw_, (cout, cin, ksize, ksize), jnp.float32) * scale
        b = jax.random.normal(kb_, (cout,), jnp.float32) * scale
        return w, b

    params = {"enc": [], "dec": []}
    keys = jax.random.split(key, 16)
    ki = 0

    # encoder: kernel 4, stride 2, padding 1
    for i in range(len(enc_nf)):
        prev_nf = 2 if i == 0 else enc_nf[i - 1]
        params["enc"].append(conv_p(keys[ki], prev_nf, enc_nf[i], 4)); ki += 1

    # decoder: kernel 3, stride 1, padding 1
    dec_in = [
        enc_nf[-1],                 # dec[0]
        dec_nf[0] * 2,              # dec[1]
        dec_nf[1] * 2,              # dec[2]
        dec_nf[2] + enc_nf[0],      # dec[3]
        dec_nf[3],                  # dec[4]
        dec_nf[4] + 2,              # dec[5] (full_size)
    ]
    for j in range(6):
        params["dec"].append(conv_p(keys[ki], dec_in[j], dec_nf[j], 3)); ki += 1

    # vm2 extra conv (len(dec_nf) == 7)
    params["vm2"] = conv_p(keys[ki], dec_nf[5], dec_nf[6], 3); ki += 1

    # flow conv: Normal(0, 1e-5) weights, zero bias (as in the PyTorch module)
    fw = jax.random.normal(keys[ki], (dim, dec_nf[-1], 3, 3), jnp.float32) * 1e-5
    fb = jnp.zeros((dim,), jnp.float32)
    params["flow"] = (fw, fb)
    return params


# ---------------------------------------------------------------------------
# Pure-JAX reference (no Pallas) used as an in-script correctness check.
# ---------------------------------------------------------------------------
def _conv_ref(x_nhwc, w_oihw, b, stride, pad, leaky):
    out = jax.lax.conv_general_dilated(
        x_nhwc,
        jnp.transpose(w_oihw, (2, 3, 1, 0)),      # OIHW -> HWIO
        window_strides=(stride, stride),
        padding=[(pad, pad), (pad, pad)],
        dimension_numbers=("NHWC", "HWIO", "NHWC"),
        precision=jax.lax.Precision.HIGHEST,
    )
    out = out + b
    if leaky:
        out = jnp.maximum(out, LEAKY_SLOPE * out)
    return out


def u_network_reference(params, src, tgt):
    x = jnp.concatenate([src, tgt], axis=1)
    x = jnp.transpose(x, (0, 2, 3, 1))            # NHWC
    x_enc = [x]
    for w, b in params["enc"]:
        x_enc.append(_conv_ref(x_enc[-1], w, b, 2, 1, True))
    y = x_enc[-1]
    for i in range(3):
        w, b = params["dec"][i]
        y = _conv_ref(y, w, b, 1, 1, True)
        y = jnp.repeat(jnp.repeat(y, 2, axis=1), 2, axis=2)
        y = jnp.concatenate([y, x_enc[-(i + 2)]], axis=-1)
    w, b = params["dec"][3]
    y = _conv_ref(y, w, b, 1, 1, True)
    w, b = params["dec"][4]
    y = _conv_ref(y, w, b, 1, 1, True)
    y = jnp.repeat(jnp.repeat(y, 2, axis=1), 2, axis=2)
    y = jnp.concatenate([y, x_enc[0]], axis=-1)
    w, b = params["dec"][5]
    y = _conv_ref(y, w, b, 1, 1, True)
    w, b = params["vm2"]
    y = _conv_ref(y, w, b, 1, 1, True)
    w, b = params["flow"]
    flow = _conv_ref(y, w, b, 1, 1, False)
    return jnp.transpose(flow, (0, 3, 1, 2))      # NCHW


if __name__ == "__main__":
    # Config consistent with the module: dim=2, vm2 (len(dec_nf)==7),
    # full_size=True, bn=None.
    enc_nf = [4, 8, 8, 8]
    dec_nf = [8, 8, 8, 8, 8, 4, 4]

    key = jax.random.PRNGKey(0)
    kp, ks, kt = jax.random.split(key, 3)
    params = init_params(kp, enc_nf, dec_nf, dim=2)

    N, H, W = 2, 16, 16
    src = jax.random.normal(ks, (N, 1, H, W), jnp.float32)   # NCHW, 1 channel
    tgt = jax.random.normal(kt, (N, 1, H, W), jnp.float32)

    forward = make_forward(params, N, H, W)
    flow = jax.block_until_ready(forward(src, tgt))

    assert flow.shape == (N, 2, H, W), flow.shape
    assert bool(jnp.all(jnp.isfinite(flow)))

    # correctness check against a pure-JAX (lax.conv, f32) reference.
    # kernel runs its matmuls in bf16 -> relaxed (but still tight) tolerance.
    ref = jax.block_until_ready(u_network_reference(params, src, tgt))
    rel_err = float(jnp.max(jnp.abs(flow - ref)) / (jnp.max(jnp.abs(ref)) + 1e-12))
    assert rel_err < 5e-2, f"mismatch vs reference: rel_err={rel_err:.3e}"

    print("KERNEL_OK")
</pallas_src>

<mosaic_0001>
module attributes {stable_mosaic.version = 11 : i64} {
  func.func @_unet_kernel(%arg0: memref<32x32xbf16, #tpu.memory_space<vmem>>, %arg1: memref<648x192xbf16, #tpu.memory_space<vmem>>, %arg2: memref<12x64xf32, #tpu.memory_space<vmem>>, %arg3: memref<32x32xf32, #tpu.memory_space<vmem>>) attributes {dimension_semantics = [], scalar_prefetch = 0 : i64, scratch_operands = 0 : i64, tpu.core_type = #tpu.core_type<tc>} {
    %c0 = arith.constant 0 : index
    %c0_0 = arith.constant 0 : index
    %0 = vector.load %arg0[%c0, %c0_0] : memref<32x32xbf16, #tpu.memory_space<vmem>>, vector<32x32xbf16>
    %c0_1 = arith.constant 0 : index
    %c0_2 = arith.constant 0 : index
    %1 = vector.load %arg1[%c0_1, %c0_2] : memref<648x192xbf16, #tpu.memory_space<vmem>>, vector<32x128xbf16>
    %cst = arith.constant dense<0.000000e+00> : vector<32x128xf32>
    %2 = tpu.matmul %0, %1, %cst {dimension_numbers = #tpu.dot_dimension_numbers<[1], [0], [0], [1], [0, 0, 1, 1], [], []>} : vector<32x32xbf16>, vector<32x128xbf16>, vector<32x128xf32> -> vector<32x128xf32>
    %3 = vector.extract_strided_slice %2 {offsets = [0, 0], sizes = [32, 32], strides = [1, 1]} : vector<32x128xf32> to vector<32x32xf32>
    %4 = vector.extract_strided_slice %2 {offsets = [0, 32], sizes = [32, 32], strides = [1, 1]} : vector<32x128xf32> to vector<32x32xf32>
    %5 = vector.extract_strided_slice %2 {offsets = [0, 64], sizes = [32, 32], strides = [1, 1]} : vector<32x128xf32> to vector<32x32xf32>
    %6 = vector.extract_strided_slice %2 {offsets = [0, 96], sizes = [32, 32], strides = [1, 1]} : vector<32x128xf32> to vector<32x32xf32>
    %7 = tpu.iota {dimensions = array<i32: 0>} : vector<32x32xi32>
    %c15_i32 = arith.constant 15 : i32
    %8 = vector.broadcast %c15_i32 : i32 to vector<32x32xi32>
    %9 = arith.andi %7, %8 : vector<32x32xi32>
    %c13_i32 = arith.constant 13 : i32
    %10 = vector.broadcast %c13_i32 : i32 to vector<32x32xi32>
    %11 = arith.cmpi sle, %9, %10 : vector<32x32xi32>
    %c30_i32 = arith.constant 30 : i32
    %12 = tpu.dynamic_rotate %6 by %c30_i32 dim 0 : vector<32x32xf32>, i32 -> vector<32x32xf32>
    %cst_3 = arith.constant 0.000000e+00 : f32
    %13 = vector.broadcast %cst_3 : f32 to vector<32x32xf32>
    %14 = arith.select %11, %12, %13 : vector<32x32xi1>, vector<32x32xf32>
    %15 = arith.addf %4, %14 : vector<32x32xf32>
    %c2_i32 = arith.constant 2 : i32
    %16 = vector.broadcast %c2_i32 : i32 to vector<32x32xi32>
    %17 = arith.cmpi sge, %9, %16 : vector<32x32xi32>
    %c2_i32_4 = arith.constant 2 : i32
    %18 = tpu.dynamic_rotate %3 by %c2_i32_4 dim 0 : vector<32x32xf32>, i32 -> vector<32x32xf32>
    %cst_5 = arith.constant 0.000000e+00 : f32
    %19 = vector.broadcast %cst_5 : f32 to vector<32x32xf32>
    %20 = arith.select %17, %18, %19 : vector<32x32xi1>, vector<32x32xf32>
    %21 = arith.addf %5, %20 : vector<32x32xf32>
    %c31_i32 = arith.constant 31 : i32
    %22 = tpu.dynamic_rotate %21 by %c31_i32 dim 0 : vector<32x32xf32>, i32 -> vector<32x32xf32>
    %23 = arith.addf %15, %22 : vector<32x32xf32>
    %24 = arith.truncf %23 : vector<32x32xf32> to vector<32x32xbf16>
    %c32 = arith.constant 32 : index
    %c0_6 = arith.constant 0 : index
    %25 = vector.load %arg1[%c32, %c0_6] : memref<648x192xbf16, #tpu.memory_space<vmem>>, vector<16x32xbf16>
    %cst_7 = arith.constant dense<0.000000e+00> : vector<16x32xf32>
    %26 = tpu.matmul %25, %24, %cst_7 {dimension_numbers = #tpu.dot_dimension_numbers<[1], [0], [0], [1], [0, 0, 1, 1], [], []>} : vector<16x32xbf16>, vector<32x32xbf16>, vector<16x32xf32> -> vector<16x32xf32>
    %c0_8 = arith.constant 0 : index
    %c0_9 = arith.constant 0 : index
    %27 = vector.load %arg2[%c0_8, %c0_9] : memref<12x64xf32, #tpu.memory_space<vmem>>, vector<1x32xf32>
    %28 = vector.broadcast %27 : vector<1x32xf32> to vector<16x32xf32>
    %29 = arith.addf %26, %28 : vector<16x32xf32>
    %cst_10 = arith.constant 2.000000e-01 : f32
    %30 = vector.broadcast %cst_10 : f32 to vector<16x32xf32>
    %31 = arith.mulf %30, %29 : vector<16x32xf32>
    %32 = arith.maximumf %29, %31 : vector<16x32xf32>
    %33 = arith.truncf %32 : vector<16x32xf32> to vector<16x32xbf16>
    %c48 = arith.constant 48 : index
    %c0_11 = arith.constant 0 : index
    %34 = vector.load %arg1[%c48, %c0_11] : memref<648x192xbf16, #tpu.memory_space<vmem>>, vector<32x128xbf16>
    %cst_12 = arith.constant dense<0.000000e+00> : vector<16x128xf32>
    %35 = tpu.matmul %33, %34, %cst_12 {dimension_numbers = #tpu.dot_dimension_numbers<[1], [0], [0], [1], [0, 0, 1, 1], [], []>} : vector<16x32xbf16>, vector<32x128xbf16>, vector<16x128xf32> -> vector<16x128xf32>
    %36 = vector.extract_strided_slice %35 {offsets = [0, 0], sizes = [16, 32], strides = [1, 1]} : vector<16x128xf32> to vector<16x32xf32>
    %37 = vector.extract_strided_slice %35 {offsets = [0, 32], sizes = [16, 32], strides = [1, 1]} : vector<16x128xf32> to vector<16x32xf32>
    %38 = vector.extract_strided_slice %35 {offsets = [0, 64], sizes = [16, 32], strides = [1, 1]} : vector<16x128xf32> to vector<16x32xf32>
    %39 = vector.extract_strided_slice %35 {offsets = [0, 96], sizes = [16, 32], strides = [1, 1]} : vector<16x128xf32> to vector<16x32xf32>
    %40 = tpu.iota {dimensions = array<i32: 0>} : vector<16x32xi32>
    %c7_i32 = arith.constant 7 : i32
    %41 = vector.broadcast %c7_i32 : i32 to vector<16x32xi32>
    %42 = arith.andi %40, %41 : vector<16x32xi32>
    %c5_i32 = arith.constant 5 : i32
    %43 = vector.broadcast %c5_i32 : i32 to vector<16x32xi32>
    %44 = arith.cmpi sle, %42, %43 : vector<16x32xi32>
    %c14_i32 = arith.constant 14 : i32
    %45 = tpu.dynamic_rotate %39 by %c14_i32 dim 0 : vector<16x32xf32>, i32 -> vector<16x32xf32>
    %cst_13 = arith.constant 0.000000e+00 : f32
    %46 = vector.broadcast %cst_13 : f32 to vector<16x32xf32>
    %47 = arith.select %44, %45, %46 : vector<16x32xi1>, vector<16x32xf32>
    %48 = arith.addf %37, %47 : vector<16x32xf32>
    %c2_i32_14 = arith.constant 2 : i32
    %49 = vector.broadcast %c2_i32_14 : i32 to vector<16x32xi32>
    %50 = arith.cmpi sge, %42, %49 : vector<16x32xi32>
    %c2_i32_15 = arith.constant 2 : i32
    %51 = tpu.dynamic_rotate %36 by %c2_i32_15 dim 0 : vector<16x32xf32>, i32 -> vector<16x32xf32>
    %cst_16 = arith.constant 0.000000e+00 : f32
    %52 = vector.broadcast %cst_16 : f32 to vector<16x32xf32>
    %53 = arith.select %50, %51, %52 : vector<16x32xi1>, vector<16x32xf32>
    %54 = arith.addf %38, %53 : vector<16x32xf32>
    %c15_i32_17 = arith.constant 15 : i32
    %55 = tpu.dynamic_rotate %54 by %c15_i32_17 dim 0 : vector<16x32xf32>, i32 -> vector<16x32xf32>
    %56 = arith.addf %48, %55 : vector<16x32xf32>
    %57 = arith.truncf %56 : vector<16x32xf32> to vector<16x32xbf16>
    %c80 = arith.constant 80 : index
    %c0_18 = arith.constant 0 : index
    %58 = vector.load %arg1[%c80, %c0_18] : memref<648x192xbf16, #tpu.memory_space<vmem>>, vector<8x16xbf16>
    %cst_19 = arith.constant dense<0.000000e+00> : vector<8x32xf32>
    %59 = tpu.matmul %58, %57, %cst_19 {dimension_numbers = #tpu.dot_dimension_numbers<[1], [0], [0], [1], [0, 0, 1, 1], [], []>} : vector<8x16xbf16>, vector<16x32xbf16>, vector<8x32xf32> -> vector<8x32xf32>
    %c1 = arith.constant 1 : index
    %c0_20 = arith.constant 0 : index
    %60 = vector.load %arg2[%c1, %c0_20] : memref<12x64xf32, #tpu.memory_space<vmem>>, vector<1x32xf32>
    %61 = vector.broadcast %60 : vector<1x32xf32> to vector<8x32xf32>
    %62 = arith.addf %59, %61 : vector<8x32xf32>
    %cst_21 = arith.constant 2.000000e-01 : f32
    %63 = vector.broadcast %cst_21 : f32 to vector<8x32xf32>
    %64 = arith.mulf %63, %62 : vector<8x32xf32>
    %65 = arith.maximumf %62, %64 : vector<8x32xf32>
    %66 = arith.truncf %65 : vector<8x32xf32> to vector<8x32xbf16>
    %c88 = arith.constant 88 : index
    %c0_22 = arith.constant 0 : index
    %67 = vector.load %arg1[%c88, %c0_22] : memref<648x192xbf16, #tpu.memory_space<vmem>>, vector<32x64xbf16>
    %cst_23 = arith.constant dense<0.000000e+00> : vector<8x64xf32>
    %68 = tpu.matmul %66, %67, %cst_23 {dimension_numbers = #tpu.dot_dimension_numbers<[1], [0], [0], [1], [0, 0, 1, 1], [], []>} : vector<8x32xbf16>, vector<32x64xbf16>, vector<8x64xf32> -> vector<8x64xf32>
    %69 = vector.extract_strided_slice %68 {offsets = [0, 0], sizes = [8, 16], strides = [1, 1]} : vector<8x64xf32> to vector<8x16xf32>
    %70 = vector.extract_strided_slice %68 {offsets = [0, 16], sizes = [8, 16], strides = [1, 1]} : vector<8x64xf32> to vector<8x16xf32>
    %71 = vector.extract_strided_slice %68 {offsets = [0, 32], sizes = [8, 16], strides = [1, 1]} : vector<8x64xf32> to vector<8x16xf32>
    %72 = vector.extract_strided_slice %68 {offsets = [0, 48], sizes = [8, 16], strides = [1, 1]} : vector<8x64xf32> to vector<8x16xf32>
    %73 = tpu.iota {dimensions = array<i32: 0>} : vector<8x16xi32>
    %c3_i32 = arith.constant 3 : i32
    %74 = vector.broadcast %c3_i32 : i32 to vector<8x16xi32>
    %75 = arith.andi %73, %74 : vector<8x16xi32>
    %c1_i32 = arith.constant 1 : i32
    %76 = vector.broadcast %c1_i32 : i32 to vector<8x16xi32>
    %77 = arith.cmpi sle, %75, %76 : vector<8x16xi32>
    %c6_i32 = arith.constant 6 : i32
    %78 = tpu.dynamic_rotate %72 by %c6_i32 dim 0 : vector<8x16xf32>, i32 -> vector<8x16xf32>
    %cst_24 = arith.constant 0.000000e+00 : f32
    %79 = vector.broadcast %cst_24 : f32 to vector<8x16xf32>
    %80 = arith.select %77, %78, %79 : vector<8x16xi1>, vector<8x16xf32>
    %81 = arith.addf %70, %80 : vector<8x16xf32>
    %c2_i32_25 = arith.constant 2 : i32
    %82 = vector.broadcast %c2_i32_25 : i32 to vector<8x16xi32>
    %83 = arith.cmpi sge, %75, %82 : vector<8x16xi32>
    %c2_i32_26 = arith.constant 2 : i32
    %84 = tpu.dynamic_rotate %69 by %c2_i32_26 dim 0 : vector<8x16xf32>, i32 -> vector<8x16xf32>
    %cst_27 = arith.constant 0.000000e+00 : f32
    %85 = vector.broadcast %cst_27 : f32 to vector<8x16xf32>
    %86 = arith.select %83, %84, %85 : vector<8x16xi1>, vector<8x16xf32>
    %87 = arith.addf %71, %86 : vector<8x16xf32>
    %c7_i32_28 = arith.constant 7 : i32
    %88 = tpu.dynamic_rotate %87 by %c7_i32_28 dim 0 : vector<8x16xf32>, i32 -> vector<8x16xf32>
    %89 = arith.addf %81, %88 : vector<8x16xf32>
    %90 = arith.truncf %89 : vector<8x16xf32> to vector<8x16xbf16>
    %c120 = arith.constant 120 : index
    %c0_29 = arith.constant 0 : index
    %91 = vector.load %arg1[%c120, %c0_29] : memref<648x192xbf16, #tpu.memory_space<vmem>>, vector<8x8xbf16>
    %cst_30 = arith.constant dense<0.000000e+00> : vector<8x16xf32>
    %92 = tpu.matmul %91, %90, %cst_30 {dimension_numbers = #tpu.dot_dimension_numbers<[1], [0], [0], [1], [0, 0, 1, 1], [], []>} : vector<8x8xbf16>, vector<8x16xbf16>, vector<8x16xf32> -> vector<8x16xf32>
    %c2 = arith.constant 2 : index
    %c0_31 = arith.constant 0 : index
    %93 = vector.load %arg2[%c2, %c0_31] : memref<12x64xf32, #tpu.memory_space<vmem>>, vector<1x16xf32>
    %94 = vector.broadcast %93 : vector<1x16xf32> to vector<8x16xf32>
    %95 = arith.addf %92, %94 : vector<8x16xf32>
    %cst_32 = arith.constant 2.000000e-01 : f32
    %96 = vector.broadcast %cst_32 : f32 to vector<8x16xf32>
    %97 = arith.mulf %96, %95 : vector<8x16xf32>
    %98 = arith.maximumf %95, %97 : vector<8x16xf32>
    %99 = arith.truncf %98 : vector<8x16xf32> to vector<8x16xbf16>
    %c128 = arith.constant 128 : index
    %c0_33 = arith.constant 0 : index
    %100 = vector.load %arg1[%c128, %c0_33] : memref<648x192xbf16, #tpu.memory_space<vmem>>, vector<16x32xbf16>
    %cst_34 = arith.constant dense<0.000000e+00> : vector<8x32xf32>
    %101 = tpu.matmul %99, %100, %cst_34 {dimension_numbers = #tpu.dot_dimension_numbers<[1], [0], [0], [1], [0, 0, 1, 1], [], []>} : vector<8x16xbf16>, vector<16x32xbf16>, vector<8x32xf32> -> vector<8x32xf32>
    %102 = vector.extract_strided_slice %101 {offsets = [0, 8], sizes = [8, 8], strides = [1, 1]} : vector<8x32xf32> to vector<8x8xf32>
    %103 = vector.extract_strided_slice %101 {offsets = [0, 16], sizes = [8, 8], strides = [1, 1]} : vector<8x32xf32> to vector<8x8xf32>
    %c7_i32_35 = arith.constant 7 : i32
    %104 = tpu.dynamic_rotate %103 by %c7_i32_35 dim 0 : vector<8x8xf32>, i32 -> vector<8x8xf32>
    %105 = arith.addf %102, %104 : vector<8x8xf32>
    %106 = arith.truncf %105 : vector<8x8xf32> to vector<8x8xbf16>
    %c144 = arith.constant 144 : index
    %c0_36 = arith.constant 0 : index
    %107 = vector.load %arg1[%c144, %c0_36] : memref<648x192xbf16, #tpu.memory_space<vmem>>, vector<8x8xbf16>
    %cst_37 = arith.constant dense<0.000000e+00> : vector<8x8xf32>
    %108 = tpu.matmul %107, %106, %cst_37 {dimension_numbers = #tpu.dot_dimension_numbers<[1], [0], [0], [1], [0, 0, 1, 1], [], []>} : vector<8x8xbf16>, vector<8x8xbf16>, vector<8x8xf32> -> vector<8x8xf32>
    %c3 = arith.constant 3 : index
    %c0_38 = arith.constant 0 : index
    %109 = vector.load %arg2[%c3, %c0_38] : memref<12x64xf32, #tpu.memory_space<vmem>>, vector<1x8xf32>
    %110 = vector.broadcast %109 : vector<1x8xf32> to vector<8x8xf32>
    %111 = arith.addf %108, %110 : vector<8x8xf32>
    %cst_39 = arith.constant 2.000000e-01 : f32
    %112 = vector.broadcast %cst_39 : f32 to vector<8x8xf32>
    %113 = arith.mulf %112, %111 : vector<8x8xf32>
    %114 = arith.maximumf %111, %113 : vector<8x8xf32>
    %115 = arith.truncf %114 : vector<8x8xf32> to vector<8x8xbf16>
    %c152 = arith.constant 152 : index
    %c0_40 = arith.constant 0 : index
    %116 = vector.load %arg1[%c152, %c0_40] : memref<648x192xbf16, #tpu.memory_space<vmem>>, vector<8x24xbf16>
    %cst_41 = arith.constant dense<0.000000e+00> : vector<8x24xf32>
    %117 = tpu.matmul %115, %116, %cst_41 {dimension_numbers = #tpu.dot_dimension_numbers<[1], [0], [0], [1], [0, 0, 1, 1], [], []>} : vector<8x8xbf16>, vector<8x24xbf16>, vector<8x24xf32> -> vector<8x24xf32>
    %118 = vector.extract_strided_slice %117 {offsets = [0, 8], sizes = [8, 8], strides = [1, 1]} : vector<8x24xf32> to vector<8x8xf32>
    %c4 = arith.constant 4 : index
    %c0_42 = arith.constant 0 : index
    %119 = vector.load %arg2[%c4, %c0_42] : memref<12x64xf32, #tpu.memory_space<vmem>>, vector<1x8xf32>
    %120 = vector.broadcast %119 : vector<1x8xf32> to vector<8x8xf32>
    %121 = arith.addf %118, %120 : vector<8x8xf32>
    %cst_43 = arith.constant 2.000000e-01 : f32
    %122 = vector.broadcast %cst_43 : f32 to vector<8x8xf32>
    %123 = arith.mulf %122, %121 : vector<8x8xf32>
    %124 = arith.maximumf %121, %123 : vector<8x8xf32>
    %125 = arith.truncf %124 : vector<8x8xf32> to vector<8x8xbf16>
    %c160 = arith.constant 160 : index
    %c0_44 = arith.constant 0 : index
    %126 = vector.load %arg1[%c160, %c0_44] : memref<648x192xbf16, #tpu.memory_space<vmem>>, vector<8x8xbf16>
    %cst_45 = arith.constant dense<0.000000e+00> : vector<8x8xf32>
    %127 = tpu.matmul %126, %125, %cst_45 {dimension_numbers = #tpu.dot_dimension_numbers<[1], [0], [0], [1], [0, 0, 1, 1], [], []>} : vector<8x8xbf16>, vector<8x8xbf16>, vector<8x8xf32> -> vector<8x8xf32>
    %128 = arith.truncf %127 : vector<8x8xf32> to vector<8x8xbf16>
    %c168 = arith.constant 168 : index
    %c0_46 = arith.constant 0 : index
    %129 = vector.load %arg1[%c168, %c0_46] : memref<648x192xbf16, #tpu.memory_space<vmem>>, vector<8x48xbf16>
    %cst_47 = arith.constant dense<0.000000e+00> : vector<8x48xf32>
    %130 = tpu.matmul %128, %129, %cst_47 {dimension_numbers = #tpu.dot_dimension_numbers<[1], [0], [0], [1], [0, 0, 1, 1], [], []>} : vector<8x8xbf16>, vector<8x48xbf16>, vector<8x48xf32> -> vector<8x48xf32>
    %c176 = arith.constant 176 : index
    %c0_48 = arith.constant 0 : index
    %131 = vector.load %arg1[%c176, %c0_48] : memref<648x192xbf16, #tpu.memory_space<vmem>>, vector<16x48xbf16>
    %cst_49 = arith.constant dense<0.000000e+00> : vector<8x48xf32>
    %132 = tpu.matmul %99, %131, %cst_49 {dimension_numbers = #tpu.dot_dimension_numbers<[1], [0], [0], [1], [0, 0, 1, 1], [], []>} : vector<8x16xbf16>, vector<16x48xbf16>, vector<8x48xf32> -> vector<8x48xf32>
    %133 = arith.addf %130, %132 : vector<8x48xf32>
    %134 = vector.extract_strided_slice %133 {offsets = [0, 0], sizes = [8, 16], strides = [1, 1]} : vector<8x48xf32> to vector<8x16xf32>
    %135 = vector.extract_strided_slice %133 {offsets = [0, 16], sizes = [8, 16], strides = [1, 1]} : vector<8x48xf32> to vector<8x16xf32>
    %136 = vector.extract_strided_slice %133 {offsets = [0, 32], sizes = [8, 16], strides = [1, 1]} : vector<8x48xf32> to vector<8x16xf32>
    %137 = tpu.iota {dimensions = array<i32: 0>} : vector<8x16xi32>
    %c1_i32_50 = arith.constant 1 : i32
    %138 = vector.broadcast %c1_i32_50 : i32 to vector<8x16xi32>
    %139 = arith.andi %137, %138 : vector<8x16xi32>
    %c1_i32_51 = arith.constant 1 : i32
    %140 = vector.broadcast %c1_i32_51 : i32 to vector<8x16xi32>
    %141 = arith.cmpi sge, %139, %140 : vector<8x16xi32>
    %c1_i32_52 = arith.constant 1 : i32
    %142 = tpu.dynamic_rotate %134 by %c1_i32_52 dim 0 : vector<8x16xf32>, i32 -> vector<8x16xf32>
    %cst_53 = arith.constant 0.000000e+00 : f32
    %143 = vector.broadcast %cst_53 : f32 to vector<8x16xf32>
    %144 = arith.select %141, %142, %143 : vector<8x16xi1>, vector<8x16xf32>
    %145 = arith.addf %135, %144 : vector<8x16xf32>
    %c0_i32 = arith.constant 0 : i32
    %146 = vector.broadcast %c0_i32 : i32 to vector<8x16xi32>
    %147 = arith.cmpi sle, %139, %146 : vector<8x16xi32>
    %c7_i32_54 = arith.constant 7 : i32
    %148 = tpu.dynamic_rotate %136 by %c7_i32_54 dim 0 : vector<8x16xf32>, i32 -> vector<8x16xf32>
    %cst_55 = arith.constant 0.000000e+00 : f32
    %149 = vector.broadcast %cst_55 : f32 to vector<8x16xf32>
    %150 = arith.select %147, %148, %149 : vector<8x16xi1>, vector<8x16xf32>
    %151 = arith.addf %145, %150 : vector<8x16xf32>
    %c5 = arith.constant 5 : index
    %c0_56 = arith.constant 0 : index
    %152 = vector.load %arg2[%c5, %c0_56] : memref<12x64xf32, #tpu.memory_space<vmem>>, vector<1x16xf32>
    %153 = vector.broadcast %152 : vector<1x16xf32> to vector<8x16xf32>
    %154 = arith.addf %151, %153 : vector<8x16xf32>
    %cst_57 = arith.constant 2.000000e-01 : f32
    %155 = vector.broadcast %cst_57 : f32 to vector<8x16xf32>
    %156 = arith.mulf %155, %154 : vector<8x16xf32>
    %157 = arith.maximumf %154, %156 : vector<8x16xf32>
    %158 = arith.truncf %157 : vector<8x16xf32> to vector<8x16xbf16>
    %c192 = arith.constant 192 : index
    %c0_58 = arith.constant 0 : index
    %159 = vector.load %arg1[%c192, %c0_58] : memref<648x192xbf16, #tpu.memory_space<vmem>>, vector<8x8xbf16>
    %cst_59 = arith.constant dense<0.000000e+00> : vector<8x16xf32>
    %160 = tpu.matmul %159, %158, %cst_59 {dimension_numbers = #tpu.dot_dimension_numbers<[1], [0], [0], [1], [0, 0, 1, 1], [], []>} : vector<8x8xbf16>, vector<8x16xbf16>, vector<8x16xf32> -> vector<8x16xf32>
    %161 = arith.truncf %160 : vector<8x16xf32> to vector<8x16xbf16>
    %c200 = arith.constant 200 : index
    %c0_60 = arith.constant 0 : index
    %162 = vector.load %arg1[%c200, %c0_60] : memref<648x192xbf16, #tpu.memory_space<vmem>>, vector<16x96xbf16>
    %cst_61 = arith.constant dense<0.000000e+00> : vector<8x96xf32>
    %163 = tpu.matmul %161, %162, %cst_61 {dimension_numbers = #tpu.dot_dimension_numbers<[1], [0], [0], [1], [0, 0, 1, 1], [], []>} : vector<8x16xbf16>, vector<16x96xbf16>, vector<8x96xf32> -> vector<8x96xf32>
    %c216 = arith.constant 216 : index
    %c0_62 = arith.constant 0 : index
    %164 = vector.load %arg1[%c216, %c0_62] : memref<648x192xbf16, #tpu.memory_space<vmem>>, vector<32x96xbf16>
    %cst_63 = arith.constant dense<0.000000e+00> : vector<8x96xf32>
    %165 = tpu.matmul %66, %164, %cst_63 {dimension_numbers = #tpu.dot_dimension_numbers<[1], [0], [0], [1], [0, 0, 1, 1], [], []>} : vector<8x32xbf16>, vector<32x96xbf16>, vector<8x96xf32> -> vector<8x96xf32>
    %166 = arith.addf %163, %165 : vector<8x96xf32>
    %167 = vector.extract_strided_slice %166 {offsets = [0, 0], sizes = [8, 32], strides = [1, 1]} : vector<8x96xf32> to vector<8x32xf32>
    %168 = vector.extract_strided_slice %166 {offsets = [0, 32], sizes = [8, 32], strides = [1, 1]} : vector<8x96xf32> to vector<8x32xf32>
    %169 = vector.extract_strided_slice %166 {offsets = [0, 64], sizes = [8, 32], strides = [1, 1]} : vector<8x96xf32> to vector<8x32xf32>
    %170 = tpu.iota {dimensions = array<i32: 0>} : vector<8x32xi32>
    %c3_i32_64 = arith.constant 3 : i32
    %171 = vector.broadcast %c3_i32_64 : i32 to vector<8x32xi32>
    %172 = arith.andi %170, %171 : vector<8x32xi32>
    %c1_i32_65 = arith.constant 1 : i32
    %173 = vector.broadcast %c1_i32_65 : i32 to vector<8x32xi32>
    %174 = arith.cmpi sge, %172, %173 : vector<8x32xi32>
    %c1_i32_66 = arith.constant 1 : i32
    %175 = tpu.dynamic_rotate %167 by %c1_i32_66 dim 0 : vector<8x32xf32>, i32 -> vector<8x32xf32>
    %cst_67 = arith.constant 0.000000e+00 : f32
    %176 = vector.broadcast %cst_67 : f32 to vector<8x32xf32>
    %177 = arith.select %174, %175, %176 : vector<8x32xi1>, vector<8x32xf32>
    %178 = arith.addf %168, %177 : vector<8x32xf32>
    %c2_i32_68 = arith.constant 2 : i32
    %179 = vector.broadcast %c2_i32_68 : i32 to vector<8x32xi32>
    %180 = arith.cmpi sle, %172, %179 : vector<8x32xi32>
    %c7_i32_69 = arith.constant 7 : i32
    %181 = tpu.dynamic_rotate %169 by %c7_i32_69 dim 0 : vector<8x32xf32>, i32 -> vector<8x32xf32>
    %cst_70 = arith.constant 0.000000e+00 : f32
    %182 = vector.broadcast %cst_70 : f32 to vector<8x32xf32>
    %183 = arith.select %180, %181, %182 : vector<8x32xi1>, vector<8x32xf32>
    %184 = arith.addf %178, %183 : vector<8x32xf32>
    %c6 = arith.constant 6 : index
    %c0_71 = arith.constant 0 : index
    %185 = vector.load %arg2[%c6, %c0_71] : memref<12x64xf32, #tpu.memory_space<vmem>>, vector<1x32xf32>
    %186 = vector.broadcast %185 : vector<1x32xf32> to vector<8x32xf32>
    %187 = arith.addf %184, %186 : vector<8x32xf32>
    %cst_72 = arith.constant 2.000000e-01 : f32
    %188 = vector.broadcast %cst_72 : f32 to vector<8x32xf32>
    %189 = arith.mulf %188, %187 : vector<8x32xf32>
    %190 = arith.maximumf %187, %189 : vector<8x32xf32>
    %191 = arith.truncf %190 : vector<8x32xf32> to vector<8x32xbf16>
    %c248 = arith.constant 248 : index
    %c0_73 = arith.constant 0 : index
    %192 = vector.load %arg1[%c248, %c0_73] : memref<648x192xbf16, #tpu.memory_space<vmem>>, vector<16x8xbf16>
    %cst_74 = arith.constant dense<0.000000e+00> : vector<16x32xf32>
    %193 = tpu.matmul %192, %191, %cst_74 {dimension_numbers = #tpu.dot_dimension_numbers<[1], [0], [0], [1], [0, 0, 1, 1], [], []>} : vector<16x8xbf16>, vector<8x32xbf16>, vector<16x32xf32> -> vector<16x32xf32>
    %194 = arith.truncf %193 : vector<16x32xf32> to vector<16x32xbf16>
    %c264 = arith.constant 264 : index
    %c0_75 = arith.constant 0 : index
    %195 = vector.load %arg1[%c264, %c0_75] : memref<648x192xbf16, #tpu.memory_space<vmem>>, vector<32x192xbf16>
    %cst_76 = arith.constant dense<0.000000e+00> : vector<16x192xf32>
    %196 = tpu.matmul %194, %195, %cst_76 {dimension_numbers = #tpu.dot_dimension_numbers<[1], [0], [0], [1], [0, 0, 1, 1], [], []>} : vector<16x32xbf16>, vector<32x192xbf16>, vector<16x192xf32> -> vector<16x192xf32>
    %c296 = arith.constant 296 : index
    %c0_77 = arith.constant 0 : index
    %197 = vector.load %arg1[%c296, %c0_77] : memref<648x192xbf16, #tpu.memory_space<vmem>>, vector<32x192xbf16>
    %cst_78 = arith.constant dense<0.000000e+00> : vector<16x192xf32>
    %198 = tpu.matmul %33, %197, %cst_78 {dimension_numbers = #tpu.dot_dimension_numbers<[1], [0], [0], [1], [0, 0, 1, 1], [], []>} : vector<16x32xbf16>, vector<32x192xbf16>, vector<16x192xf32> -> vector<16x192xf32>
    %199 = arith.addf %196, %198 : vector<16x192xf32>
    %200 = vector.extract_strided_slice %199 {offsets = [0, 0], sizes = [16, 64], strides = [1, 1]} : vector<16x192xf32> to vector<16x64xf32>
    %201 = vector.extract_strided_slice %199 {offsets = [0, 64], sizes = [16, 64], strides = [1, 1]} : vector<16x192xf32> to vector<16x64xf32>
    %202 = vector.extract_strided_slice %199 {offsets = [0, 128], sizes = [16, 64], strides = [1, 1]} : vector<16x192xf32> to vector<16x64xf32>
    %203 = tpu.iota {dimensions = array<i32: 0>} : vector<16x64xi32>
    %c7_i32_79 = arith.constant 7 : i32
    %204 = vector.broadcast %c7_i32_79 : i32 to vector<16x64xi32>
    %205 = arith.andi %203, %204 : vector<16x64xi32>
    %c1_i32_80 = arith.constant 1 : i32
    %206 = vector.broadcast %c1_i32_80 : i32 to vector<16x64xi32>
    %207 = arith.cmpi sge, %205, %206 : vector<16x64xi32>
    %c1_i32_81 = arith.constant 1 : i32
    %208 = tpu.dynamic_rotate %200 by %c1_i32_81 dim 0 : vector<16x64xf32>, i32 -> vector<16x64xf32>
    %cst_82 = arith.constant 0.000000e+00 : f32
    %209 = vector.broadcast %cst_82 : f32 to vector<16x64xf32>
    %210 = arith.select %207, %208, %209 : vector<16x64xi1>, vector<16x64xf32>
    %211 = arith.addf %201, %210 : vector<16x64xf32>
    %c6_i32_83 = arith.constant 6 : i32
    %212 = vector.broadcast %c6_i32_83 : i32 to vector<16x64xi32>
    %213 = arith.cmpi sle, %205, %212 : vector<16x64xi32>
    %c15_i32_84 = arith.constant 15 : i32
    %214 = tpu.dynamic_rotate %202 by %c15_i32_84 dim 0 : vector<16x64xf32>, i32 -> vector<16x64xf32>
    %cst_85 = arith.constant 0.000000e+00 : f32
    %215 = vector.broadcast %cst_85 : f32 to vector<16x64xf32>
    %216 = arith.select %213, %214, %215 : vector<16x64xi1>, vector<16x64xf32>
    %217 = arith.addf %211, %216 : vector<16x64xf32>
    %c7 = arith.constant 7 : index
    %c0_86 = arith.constant 0 : index
    %218 = vector.load %arg2[%c7, %c0_86] : memref<12x64xf32, #tpu.memory_space<vmem>>, vector<1x64xf32>
    %219 = vector.broadcast %218 : vector<1x64xf32> to vector<16x64xf32>
    %220 = arith.addf %217, %219 : vector<16x64xf32>
    %cst_87 = arith.constant 2.000000e-01 : f32
    %221 = vector.broadcast %cst_87 : f32 to vector<16x64xf32>
    %222 = arith.mulf %221, %220 : vector<16x64xf32>
    %223 = arith.maximumf %220, %222 : vector<16x64xf32>
    %224 = arith.truncf %223 : vector<16x64xf32> to vector<16x64xbf16>
    %c328 = arith.constant 328 : index
    %c0_88 = arith.constant 0 : index
    %225 = vector.load %arg1[%c328, %c0_88] : memref<648x192xbf16, #tpu.memory_space<vmem>>, vector<64x192xbf16>
    %cst_89 = arith.constant dense<0.000000e+00> : vector<16x192xf32>
    %226 = tpu.matmul %224, %225, %cst_89 {dimension_numbers = #tpu.dot_dimension_numbers<[1], [0], [0], [1], [0, 0, 1, 1], [], []>} : vector<16x64xbf16>, vector<64x192xbf16>, vector<16x192xf32> -> vector<16x192xf32>
    %227 = vector.extract_strided_slice %226 {offsets = [0, 0], sizes = [16, 64], strides = [1, 1]} : vector<16x192xf32> to vector<16x64xf32>
    %228 = vector.extract_strided_slice %226 {offsets = [0, 64], sizes = [16, 64], strides = [1, 1]} : vector<16x192xf32> to vector<16x64xf32>
    %229 = vector.extract_strided_slice %226 {offsets = [0, 128], sizes = [16, 64], strides = [1, 1]} : vector<16x192xf32> to vector<16x64xf32>
    %230 = tpu.iota {dimensions = array<i32: 0>} : vector<16x64xi32>
    %c7_i32_90 = arith.constant 7 : i32
    %231 = vector.broadcast %c7_i32_90 : i32 to vector<16x64xi32>
    %232 = arith.andi %230, %231 : vector<16x64xi32>
    %c1_i32_91 = arith.constant 1 : i32
    %233 = vector.broadcast %c1_i32_91 : i32 to vector<16x64xi32>
    %234 = arith.cmpi sge, %232, %233 : vector<16x64xi32>
    %c1_i32_92 = arith.constant 1 : i32
    %235 = tpu.dynamic_rotate %227 by %c1_i32_92 dim 0 : vector<16x64xf32>, i32 -> vector<16x64xf32>
    %cst_93 = arith.constant 0.000000e+00 : f32
    %236 = vector.broadcast %cst_93 : f32 to vector<16x64xf32>
    %237 = arith.select %234, %235, %236 : vector<16x64xi1>, vector<16x64xf32>
    %238 = arith.addf %228, %237 : vector<16x64xf32>
    %c6_i32_94 = arith.constant 6 : i32
    %239 = vector.broadcast %c6_i32_94 : i32 to vector<16x64xi32>
    %240 = arith.cmpi sle, %232, %239 : vector<16x64xi32>
    %c15_i32_95 = arith.constant 15 : i32
    %241 = tpu.dynamic_rotate %229 by %c15_i32_95 dim 0 : vector<16x64xf32>, i32 -> vector<16x64xf32>
    %cst_96 = arith.constant 0.000000e+00 : f32
    %242 = vector.broadcast %cst_96 : f32 to vector<16x64xf32>
    %243 = arith.select %240, %241, %242 : vector<16x64xi1>, vector<16x64xf32>
    %244 = arith.addf %238, %243 : vector<16x64xf32>
    %c8 = arith.constant 8 : index
    %c0_97 = arith.constant 0 : index
    %245 = vector.load %arg2[%c8, %c0_97] : memref<12x64xf32, #tpu.memory_space<vmem>>, vector<1x64xf32>
    %246 = vector.broadcast %245 : vector<1x64xf32> to vector<16x64xf32>
    %247 = arith.addf %244, %246 : vector<16x64xf32>
    %cst_98 = arith.constant 2.000000e-01 : f32
    %248 = vector.broadcast %cst_98 : f32 to vector<16x64xf32>
    %249 = arith.mulf %248, %247 : vector<16x64xf32>
    %250 = arith.maximumf %247, %249 : vector<16x64xf32>
    %251 = arith.truncf %250 : vector<16x64xf32> to vector<16x64xbf16>
    %c0_99 = arith.constant 0 : index
    %c0_100 = arith.constant 0 : index
    %252 = vector.load %arg0[%c0_99, %c0_100] : memref<32x32xbf16, #tpu.memory_space<vmem>>, vector<32x32xbf16>
    %c392 = arith.constant 392 : index
    %c0_101 = arith.constant 0 : index
    %253 = vector.load %arg1[%c392, %c0_101] : memref<648x192xbf16, #tpu.memory_space<vmem>>, vector<32x16xbf16>
    %cst_102 = arith.constant dense<0.000000e+00> : vector<32x64xf32>
    %254 = tpu.matmul %253, %251, %cst_102 {dimension_numbers = #tpu.dot_dimension_numbers<[1], [0], [0], [1], [0, 0, 1, 1], [], []>} : vector<32x16xbf16>, vector<16x64xbf16>, vector<32x64xf32> -> vector<32x64xf32>
    %255 = arith.truncf %254 : vector<32x64xf32> to vector<32x64xbf16>
    %c424 = arith.constant 424 : index
    %c0_103 = arith.constant 0 : index
    %256 = vector.load %arg1[%c424, %c0_103] : memref<648x192xbf16, #tpu.memory_space<vmem>>, vector<64x192xbf16>
    %cst_104 = arith.constant dense<0.000000e+00> : vector<32x192xf32>
    %257 = tpu.matmul %255, %256, %cst_104 {dimension_numbers = #tpu.dot_dimension_numbers<[1], [0], [0], [1], [0, 0, 1, 1], [], []>} : vector<32x64xbf16>, vector<64x192xbf16>, vector<32x192xf32> -> vector<32x192xf32>
    %c488 = arith.constant 488 : index
    %c0_105 = arith.constant 0 : index
    %258 = vector.load %arg1[%c488, %c0_105] : memref<648x192xbf16, #tpu.memory_space<vmem>>, vector<32x192xbf16>
    %cst_106 = arith.constant dense<0.000000e+00> : vector<32x192xf32>
    %259 = tpu.matmul %252, %258, %cst_106 {dimension_numbers = #tpu.dot_dimension_numbers<[1], [0], [0], [1], [0, 0, 1, 1], [], []>} : vector<32x32xbf16>, vector<32x192xbf16>, vector<32x192xf32> -> vector<32x192xf32>
    %260 = arith.addf %257, %259 : vector<32x192xf32>
    %261 = vector.extract_strided_slice %260 {offsets = [0, 0], sizes = [32, 64], strides = [1, 1]} : vector<32x192xf32> to vector<32x64xf32>
    %262 = vector.extract_strided_slice %260 {offsets = [0, 64], sizes = [32, 64], strides = [1, 1]} : vector<32x192xf32> to vector<32x64xf32>
    %263 = vector.extract_strided_slice %260 {offsets = [0, 128], sizes = [32, 64], strides = [1, 1]} : vector<32x192xf32> to vector<32x64xf32>
    %264 = tpu.iota {dimensions = array<i32: 0>} : vector<32x64xi32>
    %c15_i32_107 = arith.constant 15 : i32
    %265 = vector.broadcast %c15_i32_107 : i32 to vector<32x64xi32>
    %266 = arith.andi %264, %265 : vector<32x64xi32>
    %c1_i32_108 = arith.constant 1 : i32
    %267 = vector.broadcast %c1_i32_108 : i32 to vector<32x64xi32>
    %268 = arith.cmpi sge, %266, %267 : vector<32x64xi32>
    %c1_i32_109 = arith.constant 1 : i32
    %269 = tpu.dynamic_rotate %261 by %c1_i32_109 dim 0 : vector<32x64xf32>, i32 -> vector<32x64xf32>
    %cst_110 = arith.constant 0.000000e+00 : f32
    %270 = vector.broadcast %cst_110 : f32 to vector<32x64xf32>
    %271 = arith.select %268, %269, %270 : vector<32x64xi1>, vector<32x64xf32>
    %272 = arith.addf %262, %271 : vector<32x64xf32>
    %c14_i32_111 = arith.constant 14 : i32
    %273 = vector.broadcast %c14_i32_111 : i32 to vector<32x64xi32>
    %274 = arith.cmpi sle, %266, %273 : vector<32x64xi32>
    %c31_i32_112 = arith.constant 31 : i32
    %275 = tpu.dynamic_rotate %263 by %c31_i32_112 dim 0 : vector<32x64xf32>, i32 -> vector<32x64xf32>
    %cst_113 = arith.constant 0.000000e+00 : f32
    %276 = vector.broadcast %cst_113 : f32 to vector<32x64xf32>
    %277 = arith.select %274, %275, %276 : vector<32x64xi1>, vector<32x64xf32>
    %278 = arith.addf %272, %277 : vector<32x64xf32>
    %c9 = arith.constant 9 : index
    %c0_114 = arith.constant 0 : index
    %279 = vector.load %arg2[%c9, %c0_114] : memref<12x64xf32, #tpu.memory_space<vmem>>, vector<1x64xf32>
    %280 = vector.broadcast %279 : vector<1x64xf32> to vector<32x64xf32>
    %281 = arith.addf %278, %280 : vector<32x64xf32>
    %cst_115 = arith.constant 2.000000e-01 : f32
    %282 = vector.broadcast %cst_115 : f32 to vector<32x64xf32>
    %283 = arith.mulf %282, %281 : vector<32x64xf32>
    %284 = arith.maximumf %281, %283 : vector<32x64xf32>
    %285 = arith.truncf %284 : vector<32x64xf32> to vector<32x64xbf16>
    %c520 = arith.constant 520 : index
    %c0_116 = arith.constant 0 : index
    %286 = vector.load %arg1[%c520, %c0_116] : memref<648x192xbf16, #tpu.memory_space<vmem>>, vector<64x192xbf16>
    %cst_117 = arith.constant dense<0.000000e+00> : vector<32x192xf32>
    %287 = tpu.matmul %285, %286, %cst_117 {dimension_numbers = #tpu.dot_dimension_numbers<[1], [0], [0], [1], [0, 0, 1, 1], [], []>} : vector<32x64xbf16>, vector<64x192xbf16>, vector<32x192xf32> -> vector<32x192xf32>
    %288 = vector.extract_strided_slice %287 {offsets = [0, 0], sizes = [32, 64], strides = [1, 1]} : vector<32x192xf32> to vector<32x64xf32>
    %289 = vector.extract_strided_slice %287 {offsets = [0, 64], sizes = [32, 64], strides = [1, 1]} : vector<32x192xf32> to vector<32x64xf32>
    %290 = vector.extract_strided_slice %287 {offsets = [0, 128], sizes = [32, 64], strides = [1, 1]} : vector<32x192xf32> to vector<32x64xf32>
    %291 = tpu.iota {dimensions = array<i32: 0>} : vector<32x64xi32>
    %c15_i32_118 = arith.constant 15 : i32
    %292 = vector.broadcast %c15_i32_118 : i32 to vector<32x64xi32>
    %293 = arith.andi %291, %292 : vector<32x64xi32>
    %c1_i32_119 = arith.constant 1 : i32
    %294 = vector.broadcast %c1_i32_119 : i32 to vector<32x64xi32>
    %295 = arith.cmpi sge, %293, %294 : vector<32x64xi32>
    %c1_i32_120 = arith.constant 1 : i32
    %296 = tpu.dynamic_rotate %288 by %c1_i32_120 dim 0 : vector<32x64xf32>, i32 -> vector<32x64xf32>
    %cst_121 = arith.constant 0.000000e+00 : f32
    %297 = vector.broadcast %cst_121 : f32 to vector<32x64xf32>
    %298 = arith.select %295, %296, %297 : vector<32x64xi1>, vector<32x64xf32>
    %299 = arith.addf %289, %298 : vector<32x64xf32>
    %c14_i32_122 = arith.constant 14 : i32
    %300 = vector.broadcast %c14_i32_122 : i32 to vector<32x64xi32>
    %301 = arith.cmpi sle, %293, %300 : vector<32x64xi32>
    %c31_i32_123 = arith.constant 31 : i32
    %302 = tpu.dynamic_rotate %290 by %c31_i32_123 dim 0 : vector<32x64xf32>, i32 -> vector<32x64xf32>
    %cst_124 = arith.constant 0.000000e+00 : f32
    %303 = vector.broadcast %cst_124 : f32 to vector<32x64xf32>
    %304 = arith.select %301, %302, %303 : vector<32x64xi1>, vector<32x64xf32>
    %305 = arith.addf %299, %304 : vector<32x64xf32>
    %c10 = arith.constant 10 : index
    %c0_125 = arith.constant 0 : index
    %306 = vector.load %arg2[%c10, %c0_125] : memref<12x64xf32, #tpu.memory_space<vmem>>, vector<1x64xf32>
    %307 = vector.broadcast %306 : vector<1x64xf32> to vector<32x64xf32>
    %308 = arith.addf %305, %307 : vector<32x64xf32>
    %cst_126 = arith.constant 2.000000e-01 : f32
    %309 = vector.broadcast %cst_126 : f32 to vector<32x64xf32>
    %310 = arith.mulf %309, %308 : vector<32x64xf32>
    %311 = arith.maximumf %308, %310 : vector<32x64xf32>
    %312 = arith.truncf %311 : vector<32x64xf32> to vector<32x64xbf16>
    %c584 = arith.constant 584 : index
    %c0_127 = arith.constant 0 : index
    %313 = vector.load %arg1[%c584, %c0_127] : memref<648x192xbf16, #tpu.memory_space<vmem>>, vector<64x96xbf16>
    %cst_128 = arith.constant dense<0.000000e+00> : vector<32x96xf32>
    %314 = tpu.matmul %312, %313, %cst_128 {dimension_numbers = #tpu.dot_dimension_numbers<[1], [0], [0], [1], [0, 0, 1, 1], [], []>} : vector<32x64xbf16>, vector<64x96xbf16>, vector<32x96xf32> -> vector<32x96xf32>
    %315 = vector.extract_strided_slice %314 {offsets = [0, 0], sizes = [32, 32], strides = [1, 1]} : vector<32x96xf32> to vector<32x32xf32>
    %316 = vector.extract_strided_slice %314 {offsets = [0, 32], sizes = [32, 32], strides = [1, 1]} : vector<32x96xf32> to vector<32x32xf32>
    %317 = vector.extract_strided_slice %314 {offsets = [0, 64], sizes = [32, 32], strides = [1, 1]} : vector<32x96xf32> to vector<32x32xf32>
    %318 = tpu.iota {dimensions = array<i32: 0>} : vector<32x32xi32>
    %c15_i32_129 = arith.constant 15 : i32
    %319 = vector.broadcast %c15_i32_129 : i32 to vector<32x32xi32>
    %320 = arith.andi %318, %319 : vector<32x32xi32>
    %c1_i32_130 = arith.constant 1 : i32
    %321 = vector.broadcast %c1_i32_130 : i32 to vector<32x32xi32>
    %322 = arith.cmpi sge, %320, %321 : vector<32x32xi32>
    %c1_i32_131 = arith.constant 1 : i32
    %323 = tpu.dynamic_rotate %315 by %c1_i32_131 dim 0 : vector<32x32xf32>, i32 -> vector<32x32xf32>
    %cst_132 = arith.constant 0.000000e+00 : f32
    %324 = vector.broadcast %cst_132 : f32 to vector<32x32xf32>
    %325 = arith.select %322, %323, %324 : vector<32x32xi1>, vector<32x32xf32>
    %326 = arith.addf %316, %325 : vector<32x32xf32>
    %c14_i32_133 = arith.constant 14 : i32
    %327 = vector.broadcast %c14_i32_133 : i32 to vector<32x32xi32>
    %328 = arith.cmpi sle, %320, %327 : vector<32x32xi32>
    %c31_i32_134 = arith.constant 31 : i32
    %329 = tpu.dynamic_rotate %317 by %c31_i32_134 dim 0 : vector<32x32xf32>, i32 -> vector<32x32xf32>
    %cst_135 = arith.constant 0.000000e+00 : f32
    %330 = vector.broadcast %cst_135 : f32 to vector<32x32xf32>
    %331 = arith.select %328, %329, %330 : vector<32x32xi1>, vector<32x32xf32>
    %332 = arith.addf %326, %331 : vector<32x32xf32>
    %c11 = arith.constant 11 : index
    %c0_136 = arith.constant 0 : index
    %333 = vector.load %arg2[%c11, %c0_136] : memref<12x64xf32, #tpu.memory_space<vmem>>, vector<1x32xf32>
    %334 = vector.broadcast %333 : vector<1x32xf32> to vector<32x32xf32>
    %335 = arith.addf %332, %334 : vector<32x32xf32>
    %c0_137 = arith.constant 0 : index
    %c0_138 = arith.constant 0 : index
    %336 = vector.load %arg3[%c0_137, %c0_138] : memref<32x32xf32, #tpu.memory_space<vmem>>, vector<32x32xf32>
    tpu.vector_store %arg3[%c0_137, %c0_138], %335 {strides = array<i32>} : memref<32x32xf32, #tpu.memory_space<vmem>>, vector<32x32xf32>,
    return
  }
}

</mosaic_0001>

<llo_original>
// kernel: forward.1
$region0: #{forward.1}
  #allocation0 [shape = 'u32[]', space=smem, size = 0x4, offset = 0x4, fixed_abs, tag = 'smem constant byte address 0x4 - core index']
  #allocation1 [shape = 'u32[144,128]{1,0:T(1,128)}', space=vmem, size = 0x12000, scoped, tag = 'internal scratch']
  %s0 = inlined_call_operand.vmem [shape: bf16[32,32], index: 0, kind: input, shape index: {}]
  %s1 = inlined_call_operand.hbm [shape: bf16[648,192], index: 1, kind: input, shape index: {}]
  %s2 = inlined_call_operand.vmem [shape: f32[12,64], index: 2, kind: input, shape index: {}]
  %s3 = inlined_call_operand.vmem [shape: f32[32,32], index: 3, kind: output, shape index: {}]
  %s4 = sld [smem:[#allocation0]]
  $region26: #{forward.1} parent=0
    _
  %s6 = ssub.s32 1, %s4
  %s7 = scalar_select 0, %s6, %s4
  $region1: #{forward.1} parent=0
    #allocation2 [shape = 'u8[331776]{0}', space=vmem, size = 0x51000, scoped, tag = 'input window, operand 1, single buffered']
    #allocation3 [shape = 's32[1]{0}', space=sflag, size = 0x4, scoped, tag = 'scoped memory for forward.1']
    %8 = vsyncpa [#allocation3], 0
    // Predicated region
    $region2: #{forward.1} parent=1 // pred_check
      _
    $region3: #{forward.1} parent=1 // pred_check_branch
      %10 = sbr.rel (0) target = $region5
    $region4: #{forward.1} parent=1 // pred_region
      _
    $region5: #{forward.1} parent=1 // pred_fallthru
      _
    // Predicated region
    $region6: #{forward.1} parent=1 // pred_check
      _
    $region7: #{forward.1} parent=1 // pred_check_branch
      %12 = sbr.rel (0) target = $region9
    $region8: #{forward.1} parent=1 // pred_region
      %s14 = ssub.s32 10368, 10368
      %15 = vsyncadd [#allocation3], %s14
      %s16 = sshll.u32 [#allocation2], 4
      %s17 = int_to_ptr.vmem [resolvable:$true] %s16
      %22 = dma.hbm_to_vmem [thread:$0]  %s1, 10368, %s17, [#allocation3], 128, 128, 8
    $region9: #{forward.1} parent=1 // pred_fallthru
      _
    // Predicated region
    $region10: #{forward.1} parent=1 // pred_check
      _
    $region11: #{forward.1} parent=1 // pred_check_branch
      %24 = sbr.rel (0) target = $region13
    $region12: #{forward.1} parent=1 // pred_region
      _
    $region13: #{forward.1} parent=1 // pred_fallthru
      _
    // Predicated region
    $region14: #{forward.1} parent=1 // pred_check
      _
    $region15: #{forward.1} parent=1 // pred_check_branch
      %26 = sbr.rel (0) target = $region17
    $region16: #{forward.1} parent=1 // pred_region
      %27 = dma.done [#allocation3], 10368
    $region17: #{forward.1} parent=1 // pred_fallthru
      _
    %v29 = vld [vmem:[%s0] sm:$0xf]
    %v30 = vld [vmem:[%s0 + $0x4] sm:$0xf]
    %v31 = vld [vmem:[%s0 + $0x8] sm:$0xf]
    %v32 = vld [vmem:[%s0 + $0xc] sm:$0xf]
    %v33 = vld [vmem:[#allocation2] sm:$0xf]
    %v34 = vld [vmem:[#allocation2 + $0x8] sm:$0xf]
    %v35 = vld [vmem:[#allocation2 + $0x10] sm:$0xf]
    %v36 = vld [vmem:[#allocation2 + $0x18] sm:$0xf]
    %v41 = vunpack.c.l.b16 %v29
    %v42 = vunpack.c.l.b16 %v30
    %v43 = vunpack.c.l.b16 %v31
    %v44 = vunpack.c.l.b16 %v32
    %v45 = vpack.c.b16 %v42, %v41
    %v46 = vpack.c.b16 %v44, %v43
    %v51 = vunpack.c.l.b16 %v33
    %v52 = vunpack.c.l.b16 %v34
    %v53 = vunpack.c.l.b16 %v35
    %v54 = vunpack.c.l.b16 %v36
    %v55 = vpack.c.b16 %v52, %v51
    %v56 = vpack.c.b16 %v54, %v53
    %vm59 = vcmask 261120
    %v61 = vsel %vm59, %v45, 0
    %v64 = vsel %vm59, %v46, 0
    %66 = vmatprep.subr.bf16.mxu0 0
    %67 = vmatpush1.bf16.msra.mxu0 0
    %68 = vmatprep.subr.bf16.mxu0 0
    %69 = vmatpush1.bf16.msra.mxu0 0
    %70 = vmatprep.subr.bf16.mxu0 0
    %71 = vmatpush1.bf16.msra.mxu0 0
    %72 = vmatprep.subr.bf16.mxu0 0
    %73 = vmatpush1.bf16.msra.mxu0 0
    %74 = vmatprep.subr.bf16.mxu0 0
    %75 = vmatpush1.bf16.msra.mxu0 0
    %76 = vmatprep.subr.bf16.mxu0 0
    %77 = vmatpush1.bf16.msra.mxu0 0
    %78 = vmatprep.subr.bf16.mxu0 0
    %79 = vmatpush1.bf16.msra.mxu0 %v56
    %80 = vmatprep.subr.bf16.mxu0 0
    %81 = vmatpush1.bf16.msra.mxu0 %v55
    %82 = vmatprep.subr.bf16.mxu0 0
    %83 = vmatpush2.bf16.msra.mxu0 0
    %84 = vmatprep.subr.bf16.mxu0 0
    %85 = vmatpush2.bf16.msra.mxu0 0
    %86 = vmatprep.subr.bf16.mxu0 0
    %87 = vmatpush2.bf16.msra.mxu0 0
    %88 = vmatprep.subr.bf16.mxu0 0
    %89 = vmatpush2.bf16.msra.mxu0 0
    %90 = vmatprep.subr.bf16.mxu0 0
    %91 = vmatpush2.bf16.msra.mxu0 0
    %92 = vmatprep.subr.bf16.mxu0 0
    %93 = vmatpush2.bf16.msra.mxu0 0
    %94 = vmatprep.subr.bf16.mxu0 0
    %95 = vmatpush2.bf16.msra.mxu0 0
    %96 = vmatprep.subr.bf16.mxu0 0
    %97 = vmatpush2.bf16.msra.mxu0 0
    %98 = vmatprep.mubr.bf16.mxu0 0
    %99 = vmatmul.mubr.bf16.gmra.mxu0 %v61
    %v100 = vpop.f32.mrf.mxu0
    %v101 = vadd.f32 0.0, %v100
    %v102 = vpop.f32.mrf.mxu0
    %v103 = vpop.f32.mrf.mxu0
    %v104 = vadd.f32 0.0, %v103
    %v105 = vpop.f32.mrf.mxu0
    %106 = vmatprep.mubr.bf16.mxu0 0
    %107 = vmatmul.mubr.bf16.gmra.mxu0 %v64
    %v108 = vpop.f32.mrf.mxu0
    %v109 = vadd.f32 0.0, %v108
    %v110 = vpop.f32.mrf.mxu0
    %v111 = vpop.f32.mrf.mxu0
    %v112 = vadd.f32 0.0, %v111
    %v113 = vpop.f32.mrf.mxu0
    %114 = vdwg.mxu0
    %v115 = vlaneseq
    %v116 = vshrl.u32 %v115, 7
    %v117 = vadd.s32 %v116, 8
    %v118 = vadd.s32 %v116, 16
    %v119 = vadd.s32 %v116, 24
    %v120 = vand.u32 %v116, 15
    %v121 = vand.u32 %v117, 15
    %v122 = vand.u32 %v118, 15
    %v123 = vand.u32 %v119, 15
    %vm124 = vcmp.le.s32.totalorder %v120, 13
    %vm125 = vcmp.le.s32.totalorder %v121, 13
    %vm126 = vcmp.le.s32.totalorder %v122, 13
    %vm127 = vcmp.le.s32.totalorder %v123, 13
    %132 = vrot.lane.b32.xlu0 %v101, 32
    %v133 = vpop.permute.xlu0 %132
    %134 = vrot.lane.b32.xlu0 %v104, 32
    %v135 = vpop.permute.xlu0 %134
    %136 = vrot.lane.b32.xlu0 %v109, 32
    %v137 = vpop.permute.xlu0 %136
    %138 = vrot.lane.b32.xlu0 %v112, 32
    %v139 = vpop.permute.xlu0 %138
    %v144 = vrot.slane %v133, 2
    %v145 = vrot.slane %v135, 2
    %v146 = vrot.slane %v137, 2
    %v147 = vrot.slane %v139, 2
    %vm148 = vcmp.lt.s32.totalorder %v116, 6
    %v149 = vsel %vm148, %v146, %v147
    %v150 = vsel %vm148, %v145, %v146
    %v151 = vsel %vm148, %v144, %v145
    %v152 = vsel %vm148, %v147, %v144
    %v153 = vsel %vm124, %v151, 0.0
    %v154 = vsel %vm125, %v150, 0.0
    %v155 = vsel %vm126, %v149, 0.0
    %v156 = vsel %vm127, %v152, 0.0
    %161 = vrot.lane.b32.xlu0 %v153, 32
    %v162 = vpop.permute.xlu0 %161
    %163 = vrot.lane.b32.xlu0 %v154, 32
    %v164 = vpop.permute.xlu0 %163
    %165 = vrot.lane.b32.xlu0 %v155, 32
    %v166 = vpop.permute.xlu0 %165
    %167 = vrot.lane.b32.xlu0 %v156, 32
    %v168 = vpop.permute.xlu0 %167
    %v173 = vadd.f32 %v101, %v162
    %v174 = vadd.f32 %v104, %v164
    %v175 = vadd.f32 %v109, %v166
    %v176 = vadd.f32 %v112, %v168
    %vm177 = vcmp.ge.s32.totalorder %v120, 2
    %vm178 = vcmp.ge.s32.totalorder %v121, 2
    %vm179 = vcmp.ge.s32.totalorder %v122, 2
    %vm180 = vcmp.ge.s32.totalorder %v123, 2
    %v181 = vrot.slane %v101, 6
    %v182 = vrot.slane %v104, 6
    %v183 = vrot.slane %v109, 6
    %v184 = vrot.slane %v112, 6
    %vm185 = vcmp.lt.s32.totalorder %v116, 2
    %v186 = vsel %vm185, %v183, %v184
    %v187 = vsel %vm185, %v182, %v183
    %v188 = vsel %vm185, %v181, %v182
    %v189 = vsel %vm185, %v184, %v181
    %v190 = vsel %vm177, %v189, 0.0
    %v191 = vsel %vm178, %v188, 0.0
    %v192 = vsel %vm179, %v187, 0.0
    %v193 = vsel %vm180, %v186, 0.0
    %198 = vrot.lane.b32.xlu0 %v190, 64
    %v199 = vpop.permute.xlu0 %198
    %200 = vrot.lane.b32.xlu0 %v191, 64
    %v201 = vpop.permute.xlu0 %200
    %202 = vrot.lane.b32.xlu0 %v192, 64
    %v203 = vpop.permute.xlu0 %202
    %204 = vrot.lane.b32.xlu0 %v193, 64
    %v205 = vpop.permute.xlu0 %204
    %v210 = vadd.f32 %v101, %v199
    %v211 = vadd.f32 %v104, %v201
    %v212 = vadd.f32 %v109, %v203
    %v213 = vadd.f32 %v112, %v205
    %218 = vrot.lane.b32.xlu0 %v210, 64
    %v219 = vpop.permute.xlu0 %218
    %220 = vrot.lane.b32.xlu0 %v211, 64
    %v221 = vpop.permute.xlu0 %220
    %222 = vrot.lane.b32.xlu0 %v212, 64
    %v223 = vpop.permute.xlu0 %222
    %224 = vrot.lane.b32.xlu0 %v213, 64
    %v225 = vpop.permute.xlu0 %224
    %v230 = vrot.slane %v219, 1
    %v231 = vrot.slane %v221, 1
    %v232 = vrot.slane %v223, 1
    %v233 = vrot.slane %v225, 1
    %vm234 = vcmp.lt.s32.totalorder %v116, 7
    %v235 = vsel %vm234, %v232, %v233
    %v236 = vsel %vm234, %v231, %v232
    %v237 = vsel %vm234, %v230, %v231
    %v238 = vsel %vm234, %v233, %v230
    %243 = vrot.lane.b32.xlu0 %v237, 32
    %v244 = vpop.permute.xlu0 %243
    %245 = vrot.lane.b32.xlu0 %v236, 32
    %v246 = vpop.permute.xlu0 %245
    %247 = vrot.lane.b32.xlu0 %v235, 32
    %v248 = vpop.permute.xlu0 %247
    %249 = vrot.lane.b32.xlu0 %v238, 32
    %v250 = vpop.permute.xlu0 %249
    %v255 = vadd.f32 %v173, %v244
    %v256 = vadd.f32 %v174, %v246
    %v257 = vadd.f32 %v175, %v248
    %v258 = vadd.f32 %v176, %v250
    %v259 = vpack.c.bf16 %v256, %v255
    %v260 = vpack.c.bf16 %v258, %v257
    %v261 = vld [vmem:[#allocation2 + $0x20] sm:$0xf]
    %v262 = vld [vmem:[#allocation2 + $0x28] sm:$0xf]
    %v263 = vld [vmem:[%s2] sm:$0x1]
    %v264 = vlaneseq
    %v265 = vshrl.u32 %v264, 7
    %v266 = vsub.s32 0, %v265
    %v267 = vrot.slane %v263, %v266
    %v270 = vunpack.c.l.b16 %v261
    %v271 = vunpack.c.l.b16 %v262
    %v272 = vpack.c.b16 %v271, %v270
    %275 = vrot.lane.b32.xlu0 %v259, 96
    %v276 = vpop.permute.xlu0 %275
    %277 = vrot.lane.b32.xlu0 %v260, 96
    %v278 = vpop.permute.xlu0 %277
    %v282 = vsel %vm59, %v272, 0
    %284 = vmatprep.subr.bf16.mxu0 0
    %285 = vmatpush1.bf16.msra.mxu0 0
    %286 = vmatprep.subr.bf16.mxu0 0
    %287 = vmatpush1.bf16.msra.mxu0 0
    %288 = vmatprep.subr.bf16.mxu0 0
    %289 = vmatpush1.bf16.msra.mxu0 0
    %290 = vmatprep.subr.bf16.mxu0 0
    %291 = vmatpush1.bf16.msra.mxu0 0
    %292 = vmatprep.subr.bf16.mxu0 0
    %293 = vmatpush1.bf16.msra.mxu0 0
    %294 = vmatprep.subr.bf16.mxu0 0
    %295 = vmatpush1.bf16.msra.mxu0 0
    %296 = vmatprep.subr.bf16.mxu0 0
    %297 = vmatpush1.bf16.msra.mxu0 %v278
    %298 = vmatprep.subr.bf16.mxu0 0
    %299 = vmatpush1.bf16.msra.mxu0 %v276
    %300 = vmatprep.subr.bf16.mxu0 0
    %301 = vmatpush2.bf16.msra.mxu0 0
    %302 = vmatprep.subr.bf16.mxu0 0
    %303 = vmatpush2.bf16.msra.mxu0 0
    %304 = vmatprep.subr.bf16.mxu0 0
    %305 = vmatpush2.bf16.msra.mxu0 0
    %306 = vmatprep.subr.bf16.mxu0 0
    %307 = vmatpush2.bf16.msra.mxu0 0
    %308 = vmatprep.subr.bf16.mxu0 0
    %309 = vmatpush2.bf16.msra.mxu0 0
    %310 = vmatprep.subr.bf16.mxu0 0
    %311 = vmatpush2.bf16.msra.mxu0 0
    %312 = vmatprep.subr.bf16.mxu0 0
    %313 = vmatpush2.bf16.msra.mxu0 0
    %314 = vmatprep.subr.bf16.mxu0 0
    %315 = vmatpush2.bf16.msra.mxu0 0
    %316 = vmatprep.mubr.bf16.mxu0 0
    %317 = vmatmul.mubr.bf16.gmra.mxu0 %v282
    %v318 = vpop.f32.mrf.mxu0
    %v319 = vadd.f32 %v267, %v318
    %v320 = vpop.f32.mrf.mxu0
    %v321 = vpop.f32.mrf.mxu0
    %v322 = vadd.f32 %v267, %v321
    %v323 = vpop.f32.mrf.mxu0
    %324 = vdwg.mxu0
    %v325 = vmul.f32 %v319, 0.2
    %v326 = vmul.f32 %v322, 0.2
    %v327 = vmax.f32 %v319, %v325
    %v328 = vmax.f32 %v322, %v326
    %v329 = vpack.c.bf16 %v328, %v327
    %v330 = vld [vmem:[#allocation2 + $0x30] sm:$0xf]
    %v331 = vld [vmem:[#allocation2 + $0x38] sm:$0xf]
    %v332 = vld [vmem:[#allocation2 + $0x40] sm:$0xf]
    %v333 = vld [vmem:[#allocation2 + $0x48] sm:$0xf]
    %v338 = vunpack.c.l.b16 %v330
    %v339 = vunpack.c.l.b16 %v331
    %v340 = vunpack.c.l.b16 %v332
    %v341 = vunpack.c.l.b16 %v333
    %v342 = vpack.c.b16 %v339, %v338
    %v343 = vpack.c.b16 %v341, %v340
    %v347 = vsel %vm59, %v329, 0
    %349 = vmatprep.subr.bf16.mxu0 0
    %350 = vmatpush1.bf16.msra.mxu0 0
    %351 = vmatprep.subr.bf16.mxu0 0
    %352 = vmatpush1.bf16.msra.mxu0 0
    %353 = vmatprep.subr.bf16.mxu0 0
    %354 = vmatpush1.bf16.msra.mxu0 0
    %355 = vmatprep.subr.bf16.mxu0 0
    %356 = vmatpush1.bf16.msra.mxu0 0
    %357 = vmatprep.subr.bf16.mxu0 0
    %358 = vmatpush1.bf16.msra.mxu0 0
    %359 = vmatprep.subr.bf16.mxu0 0
    %360 = vmatpush1.bf16.msra.mxu0 0
    %361 = vmatprep.subr.bf16.mxu0 0
    %362 = vmatpush1.bf16.msra.mxu0 %v343
    %363 = vmatprep.subr.bf16.mxu0 0
    %364 = vmatpush1.bf16.msra.mxu0 %v342
    %365 = vmatprep.subr.bf16.mxu0 0
    %366 = vmatpush2.bf16.msra.mxu0 0
    %367 = vmatprep.subr.bf16.mxu0 0
    %368 = vmatpush2.bf16.msra.mxu0 0
    %369 = vmatprep.subr.bf16.mxu0 0
    %370 = vmatpush2.bf16.msra.mxu0 0
    %371 = vmatprep.subr.bf16.mxu0 0
    %372 = vmatpush2.bf16.msra.mxu0 0
    %373 = vmatprep.subr.bf16.mxu0 0
    %374 = vmatpush2.bf16.msra.mxu0 0
    %375 = vmatprep.subr.bf16.mxu0 0
    %376 = vmatpush2.bf16.msra.mxu0 0
    %377 = vmatprep.subr.bf16.mxu0 0
    %378 = vmatpush2.bf16.msra.mxu0 0
    %379 = vmatprep.subr.bf16.mxu0 0
    %380 = vmatpush2.bf16.msra.mxu0 0
    %381 = vmatprep.mubr.bf16.mxu0 0
    %382 = vmatmul.mubr.bf16.gmra.mxu0 %v347
    %v383 = vpop.f32.mrf.mxu0
    %v384 = vadd.f32 0.0, %v383
    %v385 = vpop.f32.mrf.mxu0
    %v386 = vpop.f32.mrf.mxu0
    %v387 = vadd.f32 0.0, %v386
    %v388 = vpop.f32.mrf.mxu0
    %389 = vdwg.mxu0
    %v390 = vand.u32 %v116, 7
    %v391 = vand.u32 %v117, 7
    %vm392 = vcmp.le.s32.totalorder %v390, 5
    %vm393 = vcmp.le.s32.totalorder %v391, 5
    %396 = vrot.lane.b32.xlu0 %v384, 32
    %v397 = vpop.permute.xlu0 %396
    %398 = vrot.lane.b32.xlu0 %v387, 32
    %v399 = vpop.permute.xlu0 %398
    %v402 = vrot.slane %v397, 2
    %v403 = vrot.slane %v399, 2
    %v404 = vsel %vm148, %v402, %v403
    %v405 = vsel %vm148, %v403, %v402
    %v406 = vsel %vm392, %v404, 0.0
    %v407 = vsel %vm393, %v405, 0.0
    %410 = vrot.lane.b32.xlu0 %v406, 32
    %v411 = vpop.permute.xlu0 %410
    %412 = vrot.lane.b32.xlu0 %v407, 32
    %v413 = vpop.permute.xlu0 %412
    %v416 = vadd.f32 %v384, %v411
    %v417 = vadd.f32 %v387, %v413
    %vm418 = vcmp.ge.s32.totalorder %v390, 2
    %vm419 = vcmp.ge.s32.totalorder %v391, 2
    %v420 = vrot.slane %v384, 6
    %v421 = vrot.slane %v387, 6
    %v422 = vsel %vm185, %v420, %v421
    %v423 = vsel %vm185, %v421, %v420
    %v424 = vsel %vm418, %v423, 0.0
    %v425 = vsel %vm419, %v422, 0.0
    %428 = vrot.lane.b32.xlu0 %v424, 64
    %v429 = vpop.permute.xlu0 %428
    %430 = vrot.lane.b32.xlu0 %v425, 64
    %v431 = vpop.permute.xlu0 %430
    %v434 = vadd.f32 %v384, %v429
    %v435 = vadd.f32 %v387, %v431
    %438 = vrot.lane.b32.xlu0 %v434, 64
    %v439 = vpop.permute.xlu0 %438
    %440 = vrot.lane.b32.xlu0 %v435, 64
    %v441 = vpop.permute.xlu0 %440
    %v444 = vrot.slane %v439, 1
    %v445 = vrot.slane %v441, 1
    %v446 = vsel %vm234, %v444, %v445
    %v447 = vsel %vm234, %v445, %v444
    %450 = vrot.lane.b32.xlu0 %v446, 32
    %v451 = vpop.permute.xlu0 %450
    %452 = vrot.lane.b32.xlu0 %v447, 32
    %v453 = vpop.permute.xlu0 %452
    %v456 = vadd.f32 %v416, %v451
    %v457 = vadd.f32 %v417, %v453
    %v458 = vpack.c.bf16 %v457, %v456
    %v459 = vld [vmem:[#allocation2 + $0x50] sm:$0xf]
    %v460 = vld [vmem:[%s2 + $0x1] sm:$0x1]
    %v461 = vlaneseq
    %v462 = vshrl.u32 %v461, 7
    %v463 = vsub.s32 0, %v462
    %v464 = vrot.slane %v460, %v463
    %466 = vrot.lane.b32.xlu0 %v458, 96
    %v467 = vpop.permute.xlu0 %466
    %vm469 = vcmask 130048
    %v471 = vsel %vm469, %v459, 0
    %473 = vmatprep.subr.bf16.mxu0 0
    %474 = vmatpush1.bf16.msra.mxu0 0
    %475 = vmatprep.subr.bf16.mxu0 0
    %476 = vmatpush1.bf16.msra.mxu0 0
    %477 = vmatprep.subr.bf16.mxu0 0
    %478 = vmatpush1.bf16.msra.mxu0 0
    %479 = vmatprep.subr.bf16.mxu0 0
    %480 = vmatpush1.bf16.msra.mxu0 0
    %481 = vmatprep.subr.bf16.mxu0 0
    %482 = vmatpush1.bf16.msra.mxu0 0
    %483 = vmatprep.subr.bf16.mxu0 0
    %484 = vmatpush1.bf16.msra.mxu0 0
    %485 = vmatprep.subr.bf16.mxu0 0
    %486 = vmatpush1.bf16.msra.mxu0 0
    %487 = vmatprep.subr.bf16.mxu0 0
    %488 = vmatpush1.bf16.msra.mxu0 %v467
    %489 = vmatprep.subr.bf16.mxu0 0
    %490 = vmatpush2.bf16.msra.mxu0 0
    %491 = vmatprep.subr.bf16.mxu0 0
    %492 = vmatpush2.bf16.msra.mxu0 0
    %493 = vmatprep.subr.bf16.mxu0 0
    %494 = vmatpush2.bf16.msra.mxu0 0
    %495 = vmatprep.subr.bf16.mxu0 0
    %496 = vmatpush2.bf16.msra.mxu0 0
    %497 = vmatprep.subr.bf16.mxu0 0
    %498 = vmatpush2.bf16.msra.mxu0 0
    %499 = vmatprep.subr.bf16.mxu0 0
    %500 = vmatpush2.bf16.msra.mxu0 0
    %501 = vmatprep.subr.bf16.mxu0 0
    %502 = vmatpush2.bf16.msra.mxu0 0
    %503 = vmatprep.subr.bf16.mxu0 0
    %504 = vmatpush2.bf16.msra.mxu0 0
    %505 = vmatprep.mubr.bf16.mxu0 0
    %506 = vmatmul.mubr.bf16.gmra.mxu0 %v471
    %v507 = vpop.f32.mrf.mxu0
    %v508 = vadd.f32 %v464, %v507
    %v509 = vpop.f32.mrf.mxu0
    %v510 = vpop.f32.mrf.mxu0
    %v511 = vpop.f32.mrf.mxu0
    %512 = vdwg.mxu0
    %v513 = vmul.f32 %v508, 0.2
    %v514 = vmax.f32 %v508, %v513
    %v515 = vpack.c.bf16 %v514, %v514
    %v516 = vld [vmem:[#allocation2 + $0x58] sm:$0xf]
    %v517 = vld [vmem:[#allocation2 + $0x60] sm:$0xf]
    %v518 = vld [vmem:[#allocation2 + $0x68] sm:$0xf]
    %v519 = vld [vmem:[#allocation2 + $0x70] sm:$0xf]
    %v524 = vunpack.c.l.b16 %v516
    %v525 = vunpack.c.l.b16 %v517
    %v526 = vunpack.c.l.b16 %v518
    %v527 = vunpack.c.l.b16 %v519
    %v528 = vpack.c.b16 %v525, %v524
    %v529 = vpack.c.b16 %v527, %v526
    %v533 = vsel %vm59, %v515, 0
    %535 = vmatprep.subr.bf16.mxu0 0
    %536 = vmatpush1.bf16.msra.mxu0 0
    %537 = vmatprep.subr.bf16.mxu0 0
    %538 = vmatpush1.bf16.msra.mxu0 0
    %539 = vmatprep.subr.bf16.mxu0 0
    %540 = vmatpush1.bf16.msra.mxu0 0
    %541 = vmatprep.subr.bf16.mxu0 0
    %542 = vmatpush1.bf16.msra.mxu0 0
    %543 = vmatprep.subr.bf16.mxu0 0
    %544 = vmatpush1.bf16.msra.mxu0 0
    %545 = vmatprep.subr.bf16.mxu0 0
    %546 = vmatpush1.bf16.msra.mxu0 0
    %547 = vmatprep.subr.bf16.mxu0 0
    %548 = vmatpush1.bf16.msra.mxu0 %v529
    %549 = vmatprep.subr.bf16.mxu0 0
    %550 = vmatpush1.bf16.msra.mxu0 %v528
    %551 = vmatprep.subr.bf16.mxu0 0
    %552 = vmatpush2.bf16.msra.mxu0 0
    %553 = vmatprep.subr.bf16.mxu0 0
    %554 = vmatpush2.bf16.msra.mxu0 0
    %555 = vmatprep.subr.bf16.mxu0 0
    %556 = vmatpush2.bf16.msra.mxu0 0
    %557 = vmatprep.subr.bf16.mxu0 0
    %558 = vmatpush2.bf16.msra.mxu0 0
    %559 = vmatprep.subr.bf16.mxu0 0
    %560 = vmatpush2.bf16.msra.mxu0 0
    %561 = vmatprep.subr.bf16.mxu0 0
    %562 = vmatpush2.bf16.msra.mxu0 0
    %563 = vmatprep.subr.bf16.mxu0 0
    %564 = vmatpush2.bf16.msra.mxu0 0
    %565 = vmatprep.subr.bf16.mxu0 0
    %566 = vmatpush2.bf16.msra.mxu0 0
    %567 = vmatprep.mubr.bf16.mxu0 0
    %568 = vmatmul.mubr.bf16.gmra.mxu0 %v533
    %v569 = vpop.f32.mrf.mxu0
    %v570 = vadd.f32 0.0, %v569
    %v571 = vpop.f32.mrf.mxu0
    %v572 = vpop.f32.mrf.mxu0
    %v573 = vpop.f32.mrf.mxu0
    %574 = vdwg.mxu0
    %v575 = vand.u32 %v116, 3
    %vm576 = vcmp.le.s32.totalorder %v575, 1
    %578 = vrot.lane.b32.xlu0 %v570, 80
    %v579 = vpop.permute.xlu0 %578
    %v581 = vrot.slane %v579, 2
    %v582 = vsel %vm576, %v581, 0.0
    %584 = vrot.lane.b32.xlu0 %v582, 16
    %v585 = vpop.permute.xlu0 %584
    %v587 = vadd.f32 %v570, %v585
    %vm588 = vcmp.ge.s32.totalorder %v575, 2
    %v589 = vrot.slane %v570, 6
    %v590 = vsel %vm588, %v589, 0.0
    %592 = vrot.lane.b32.xlu0 %v590, 32
    %v593 = vpop.permute.xlu0 %592
    %v595 = vadd.f32 %v570, %v593
    %597 = vrot.lane.b32.xlu0 %v595, 96
    %v598 = vpop.permute.xlu0 %597
    %v600 = vrot.slane %v598, 1
    %602 = vrot.lane.b32.xlu0 %v600, 16
    %v603 = vpop.permute.xlu0 %602
    %v605 = vadd.f32 %v587, %v603
    %v606 = vpack.c.bf16 %v605, %v605
    %v607 = vld [vmem:[#allocation2 + $0x78] sm:$0xf]
    %v608 = vld [vmem:[%s2 + $0x2] sm:$0x1]
    %v609 = vlaneseq
    %v610 = vshrl.u32 %v609, 7
    %v611 = vsub.s32 0, %v610
    %v612 = vrot.slane %v608, %v611
    %614 = vrot.lane.b32.xlu0 %v606, 112
    %v615 = vpop.permute.xlu0 %614
    %vm616 = vcmask 64512
    %v618 = vsel %vm616, %v607, 0
    %vm620 = vcmask 1043456
    %v622 = vsel %vm620, %v615, 0
    %624 = vmatprep.subr.bf16.mxu0 0
    %625 = vmatpush1.bf16.msra.mxu0 0
    %626 = vmatprep.subr.bf16.mxu0 0
    %627 = vmatpush1.bf16.msra.mxu0 0
    %628 = vmatprep.subr.bf16.mxu0 0
    %629 = vmatpush1.bf16.msra.mxu0 0
    %630 = vmatprep.subr.bf16.mxu0 0
    %631 = vmatpush1.bf16.msra.mxu0 0
    %632 = vmatprep.subr.bf16.mxu0 0
    %633 = vmatpush1.bf16.msra.mxu0 0
    %634 = vmatprep.subr.bf16.mxu0 0
    %635 = vmatpush1.bf16.msra.mxu0 0
    %636 = vmatprep.subr.bf16.mxu0 0
    %637 = vmatpush1.bf16.msra.mxu0 0
    %638 = vmatprep.subr.bf16.mxu0 0
    %639 = vmatpush1.bf16.msra.mxu0 %v622
    %640 = vmatprep.subr.bf16.mxu0 0
    %641 = vmatpush2.bf16.msra.mxu0 0
    %642 = vmatprep.subr.bf16.mxu0 0
    %643 = vmatpush2.bf16.msra.mxu0 0
    %644 = vmatprep.subr.bf16.mxu0 0
    %645 = vmatpush2.bf16.msra.mxu0 0
    %646 = vmatprep.subr.bf16.mxu0 0
    %647 = vmatpush2.bf16.msra.mxu0 0
    %648 = vmatprep.subr.bf16.mxu0 0
    %649 = vmatpush2.bf16.msra.mxu0 0
    %650 = vmatprep.subr.bf16.mxu0 0
    %651 = vmatpush2.bf16.msra.mxu0 0
    %652 = vmatprep.subr.bf16.mxu0 0
    %653 = vmatpush2.bf16.msra.mxu0 0
    %654 = vmatprep.subr.bf16.mxu0 0
    %655 = vmatpush2.bf16.msra.mxu0 0
    %656 = vmatprep.mubr.bf16.mxu0 0
    %657 = vmatmul.mubr.bf16.gmra.mxu0 %v618
    %v658 = vpop.f32.mrf.mxu0
    %v659 = vadd.f32 %v612, %v658
    %v660 = vpop.f32.mrf.mxu0
    %v661 = vpop.f32.mrf.mxu0
    %v662 = vpop.f32.mrf.mxu0
    %663 = vdwg.mxu0
    %v664 = vmul.f32 %v659, 0.2
    %v665 = vmax.f32 %v659, %v664
    %v666 = vpack.c.bf16 %v665, %v665
    %v667 = vld [vmem:[#allocation2 + $0x80] sm:$0xf]
    %v668 = vld [vmem:[#allocation2 + $0x88] sm:$0xf]
    %v671 = vunpack.c.l.b16 %v667
    %v672 = vunpack.c.l.b16 %v668
    %v673 = vpack.c.b16 %v672, %v671
    %v676 = vsel %vm469, %v666, 0
    %678 = vmatprep.subr.bf16.mxu0 0
    %679 = vmatpush1.bf16.msra.mxu0 0
    %680 = vmatprep.subr.bf16.mxu0 0
    %681 = vmatpush1.bf16.msra.mxu0 0
    %682 = vmatprep.subr.bf16.mxu0 0
    %683 = vmatpush1.bf16.msra.mxu0 0
    %684 = vmatprep.subr.bf16.mxu0 0
    %685 = vmatpush1.bf16.msra.mxu0 0
    %686 = vmatprep.subr.bf16.mxu0 0
    %687 = vmatpush1.bf16.msra.mxu0 0
    %688 = vmatprep.subr.bf16.mxu0 0
    %689 = vmatpush1.bf16.msra.mxu0 0
    %690 = vmatprep.subr.bf16.mxu0 0
    %691 = vmatpush1.bf16.msra.mxu0 0
    %692 = vmatprep.subr.bf16.mxu0 0
    %693 = vmatpush1.bf16.msra.mxu0 %v673
    %694 = vmatprep.subr.bf16.mxu0 0
    %695 = vmatpush2.bf16.msra.mxu0 0
    %696 = vmatprep.subr.bf16.mxu0 0
    %697 = vmatpush2.bf16.msra.mxu0 0
    %698 = vmatprep.subr.bf16.mxu0 0
    %699 = vmatpush2.bf16.msra.mxu0 0
    %700 = vmatprep.subr.bf16.mxu0 0
    %701 = vmatpush2.bf16.msra.mxu0 0
    %702 = vmatprep.subr.bf16.mxu0 0
    %703 = vmatpush2.bf16.msra.mxu0 0
    %704 = vmatprep.subr.bf16.mxu0 0
    %705 = vmatpush2.bf16.msra.mxu0 0
    %706 = vmatprep.subr.bf16.mxu0 0
    %707 = vmatpush2.bf16.msra.mxu0 0
    %708 = vmatprep.subr.bf16.mxu0 0
    %709 = vmatpush2.bf16.msra.mxu0 0
    %710 = vmatprep.mubr.bf16.mxu0 0
    %711 = vmatmul.mubr.bf16.gmra.mxu0 %v676
    %v712 = vpop.f32.mrf.mxu0
    %v713 = vadd.f32 0.0, %v712
    %v714 = vpop.f32.mrf.mxu0
    %v715 = vpop.f32.mrf.mxu0
    %v716 = vpop.f32.mrf.mxu0
    %717 = vdwg.mxu0
    %719 = vrot.lane.b32.xlu0 %v713, 112
    %v720 = vpop.permute.xlu0 %719
    %v722 = vrot.slane %v720, 1
    %724 = vrot.lane.b32.xlu0 %v722, 8
    %v725 = vpop.permute.xlu0 %724
    %v727 = vadd.f32 %v713, %v725
    %v728 = vpack.c.bf16 %v727, %v727
    %v729 = vld [vmem:[#allocation2 + $0x90] sm:$0xf]
    %v730 = vld [vmem:[%s2 + $0x3] sm:$0x1]
    %v731 = vlaneseq
    %v732 = vshrl.u32 %v731, 7
    %v733 = vsub.s32 0, %v732
    %v734 = vrot.slane %v730, %v733
    %736 = vrot.lane.b32.xlu0 %v728, 120
    %v737 = vpop.permute.xlu0 %736
    %v739 = vsel %vm616, %v729, 0
    %v742 = vsel %vm620, %v737, 0
    %744 = vmatprep.subr.bf16.mxu0 0
    %745 = vmatpush1.bf16.msra.mxu0 0
    %746 = vmatprep.subr.bf16.mxu0 0
    %747 = vmatpush1.bf16.msra.mxu0 0
    %748 = vmatprep.subr.bf16.mxu0 0
    %749 = vmatpush1.bf16.msra.mxu0 0
    %750 = vmatprep.subr.bf16.mxu0 0
    %751 = vmatpush1.bf16.msra.mxu0 0
    %752 = vmatprep.subr.bf16.mxu0 0
    %753 = vmatpush1.bf16.msra.mxu0 0
    %754 = vmatprep.subr.bf16.mxu0 0
    %755 = vmatpush1.bf16.msra.mxu0 0
    %756 = vmatprep.subr.bf16.mxu0 0
    %757 = vmatpush1.bf16.msra.mxu0 0
    %758 = vmatprep.subr.bf16.mxu0 0
    %759 = vmatpush1.bf16.msra.mxu0 %v742
    %760 = vmatprep.subr.bf16.mxu0 0
    %761 = vmatpush2.bf16.msra.mxu0 0
    %762 = vmatprep.subr.bf16.mxu0 0
    %763 = vmatpush2.bf16.msra.mxu0 0
    %764 = vmatprep.subr.bf16.mxu0 0
    %765 = vmatpush2.bf16.msra.mxu0 0
    %766 = vmatprep.subr.bf16.mxu0 0
    %767 = vmatpush2.bf16.msra.mxu0 0
    %768 = vmatprep.subr.bf16.mxu0 0
    %769 = vmatpush2.bf16.msra.mxu0 0
    %770 = vmatprep.subr.bf16.mxu0 0
    %771 = vmatpush2.bf16.msra.mxu0 0
    %772 = vmatprep.subr.bf16.mxu0 0
    %773 = vmatpush2.bf16.msra.mxu0 0
    %774 = vmatprep.subr.bf16.mxu0 0
    %775 = vmatpush2.bf16.msra.mxu0 0
    %776 = vmatprep.mubr.bf16.mxu0 0
    %777 = vmatmul.mubr.bf16.gmra.mxu0 %v739
    %v778 = vpop.f32.mrf.mxu0
    %v779 = vadd.f32 %v734, %v778
    %v780 = vpop.f32.mrf.mxu0
    %v781 = vpop.f32.mrf.mxu0
    %v782 = vpop.f32.mrf.mxu0
    %783 = vdwg.mxu0
    %v784 = vmul.f32 %v779, 0.2
    %v785 = vmax.f32 %v779, %v784
    %v786 = vpack.c.bf16 %v785, %v785
    %v787 = vld [vmem:[#allocation2 + $0x98] sm:$0xf]
    %v789 = vsel %vm616, %v786, 0
    %v792 = vsel %vm620, %v787, 0
    %794 = vmatprep.subr.bf16.mxu0 0
    %795 = vmatpush1.bf16.msra.mxu0 0
    %796 = vmatprep.subr.bf16.mxu0 0
    %797 = vmatpush1.bf16.msra.mxu0 0
    %798 = vmatprep.subr.bf16.mxu0 0
    %799 = vmatpush1.bf16.msra.mxu0 0
    %800 = vmatprep.subr.bf16.mxu0 0
    %801 = vmatpush1.bf16.msra.mxu0 0
    %802 = vmatprep.subr.bf16.mxu0 0
    %803 = vmatpush1.bf16.msra.mxu0 0
    %804 = vmatprep.subr.bf16.mxu0 0
    %805 = vmatpush1.bf16.msra.mxu0 0
    %806 = vmatprep.subr.bf16.mxu0 0
    %807 = vmatpush1.bf16.msra.mxu0 0
    %808 = vmatprep.subr.bf16.mxu0 0
    %809 = vmatpush1.bf16.msra.mxu0 %v792
    %810 = vmatprep.subr.bf16.mxu0 0
    %811 = vmatpush2.bf16.msra.mxu0 0
    %812 = vmatprep.subr.bf16.mxu0 0
    %813 = vmatpush2.bf16.msra.mxu0 0
    %814 = vmatprep.subr.bf16.mxu0 0
    %815 = vmatpush2.bf16.msra.mxu0 0
    %816 = vmatprep.subr.bf16.mxu0 0
    %817 = vmatpush2.bf16.msra.mxu0 0
    %818 = vmatprep.subr.bf16.mxu0 0
    %819 = vmatpush2.bf16.msra.mxu0 0
    %820 = vmatprep.subr.bf16.mxu0 0
    %821 = vmatpush2.bf16.msra.mxu0 0
    %822 = vmatprep.subr.bf16.mxu0 0
    %823 = vmatpush2.bf16.msra.mxu0 0
    %824 = vmatprep.subr.bf16.mxu0 0
    %825 = vmatpush2.bf16.msra.mxu0 0
    %826 = vmatprep.mubr.bf16.mxu0 0
    %827 = vmatmul.mubr.bf16.gmra.mxu0 %v789
    %v828 = vpop.f32.mrf.mxu0
    %v829 = vadd.f32 0.0, %v828
    %v830 = vpop.f32.mrf.mxu0
    %v831 = vpop.f32.mrf.mxu0
    %v832 = vpop.f32.mrf.mxu0
    %833 = vdwg.mxu0
    %v834 = vld [vmem:[%s2 + $0x4] sm:$0x1]
    %v835 = vlaneseq
    %v836 = vshrl.u32 %v835, 7
    %v837 = vsub.s32 0, %v836
    %v838 = vrot.slane %v834, %v837
    %840 = vrot.lane.b32.xlu0 %v838, 8
    %v841 = vpop.permute.xlu0 %840
    %v843 = vadd.f32 %v829, %v841
    %v844 = vmul.f32 %v843, 0.2
    %v845 = vmax.f32 %v843, %v844
    %v846 = vpack.c.bf16 %v845, %v845
    %v847 = vld [vmem:[#allocation2 + $0xa0] sm:$0xf]
    %849 = vrot.lane.b32.xlu0 %v846, 120
    %v850 = vpop.permute.xlu0 %849
    %v852 = vsel %vm616, %v847, 0
    %v855 = vsel %vm620, %v850, 0
    %857 = vmatprep.subr.bf16.mxu0 0
    %858 = vmatpush1.bf16.msra.mxu0 0
    %859 = vmatprep.subr.bf16.mxu0 0
    %860 = vmatpush1.bf16.msra.mxu0 0
    %861 = vmatprep.subr.bf16.mxu0 0
    %862 = vmatpush1.bf16.msra.mxu0 0
    %863 = vmatprep.subr.bf16.mxu0 0
    %864 = vmatpush1.bf16.msra.mxu0 0
    %865 = vmatprep.subr.bf16.mxu0 0
    %866 = vmatpush1.bf16.msra.mxu0 0
    %867 = vmatprep.subr.bf16.mxu0 0
    %868 = vmatpush1.bf16.msra.mxu0 0
    %869 = vmatprep.subr.bf16.mxu0 0
    %870 = vmatpush1.bf16.msra.mxu0 0
    %871 = vmatprep.subr.bf16.mxu0 0
    %872 = vmatpush1.bf16.msra.mxu0 %v855
    %873 = vmatprep.subr.bf16.mxu0 0
    %874 = vmatpush2.bf16.msra.mxu0 0
    %875 = vmatprep.subr.bf16.mxu0 0
    %876 = vmatpush2.bf16.msra.mxu0 0
    %877 = vmatprep.subr.bf16.mxu0 0
    %878 = vmatpush2.bf16.msra.mxu0 0
    %879 = vmatprep.subr.bf16.mxu0 0
    %880 = vmatpush2.bf16.msra.mxu0 0
    %881 = vmatprep.subr.bf16.mxu0 0
    %882 = vmatpush2.bf16.msra.mxu0 0
    %883 = vmatprep.subr.bf16.mxu0 0
    %884 = vmatpush2.bf16.msra.mxu0 0
    %885 = vmatprep.subr.bf16.mxu0 0
    %886 = vmatpush2.bf16.msra.mxu0 0
    %887 = vmatprep.subr.bf16.mxu0 0
    %888 = vmatpush2.bf16.msra.mxu0 0
    %889 = vmatprep.mubr.bf16.mxu0 0
    %890 = vmatmul.mubr.bf16.gmra.mxu0 %v852
    %v891 = vpop.f32.mrf.mxu0
    %v892 = vadd.f32 0.0, %v891
    %v893 = vpop.f32.mrf.mxu0
    %v894 = vpop.f32.mrf.mxu0
    %v895 = vpop.f32.mrf.mxu0
    %896 = vdwg.mxu0
    %v897 = vpack.c.bf16 %v892, %v892
    %v898 = vld [vmem:[#allocation2 + $0xa8] sm:$0xf]
    %v899 = vld [vmem:[#allocation2 + $0xb0] sm:$0xf]
    %v900 = vld [vmem:[#allocation2 + $0xb8] sm:$0xf]
    %v903 = vunpack.c.l.b16 %v899
    %v904 = vunpack.c.l.b16 %v900
    %v905 = vpack.c.b16 %v904, %v903
    %907 = vmatprep.subr.bf16.mxu0 0
    %908 = vmatpush1.bf16.msra.mxu0 0
    %909 = vmatprep.subr.bf16.mxu0 0
    %910 = vmatpush1.bf16.msra.mxu0 0
    %911 = vmatprep.subr.bf16.mxu0 0
    %912 = vmatpush1.bf16.msra.mxu0 0
    %913 = vmatprep.subr.bf16.mxu0 0
    %914 = vmatpush1.bf16.msra.mxu0 0
    %915 = vmatprep.subr.bf16.mxu0 0
    %916 = vmatpush1.bf16.msra.mxu0 0
    %917 = vmatprep.subr.bf16.mxu0 0
    %918 = vmatpush1.bf16.msra.mxu0 0
    %919 = vmatprep.subr.bf16.mxu0 0
    %920 = vmatpush1.bf16.msra.mxu0 0
    %921 = vmatprep.subr.bf16.mxu0 0
    %922 = vmatpush1.bf16.msra.mxu0 %v905
    %923 = vmatprep.subr.bf16.mxu0 0
    %924 = vmatpush2.bf16.msra.mxu0 0
    %925 = vmatprep.subr.bf16.mxu0 0
    %926 = vmatpush2.bf16.msra.mxu0 0
    %927 = vmatprep.subr.bf16.mxu0 0
    %928 = vmatpush2.bf16.msra.mxu0 0
    %929 = vmatprep.subr.bf16.mxu0 0
    %930 = vmatpush2.bf16.msra.mxu0 0
    %931 = vmatprep.subr.bf16.mxu0 0
    %932 = vmatpush2.bf16.msra.mxu0 0
    %933 = vmatprep.subr.bf16.mxu0 0
    %934 = vmatpush2.bf16.msra.mxu0 0
    %935 = vmatprep.subr.bf16.mxu0 0
    %936 = vmatpush2.bf16.msra.mxu0 0
    %937 = vmatprep.subr.bf16.mxu0 0
    %938 = vmatpush2.bf16.msra.mxu0 0
    %939 = vmatprep.mubr.bf16.mxu0 0
    %940 = vmatmul.mubr.bf16.gmra.mxu0 %v676
    %v941 = vpop.f32.mrf.mxu0
    %v942 = vadd.f32 0.0, %v941
    %v943 = vpop.f32.mrf.mxu0
    %v944 = vpop.f32.mrf.mxu0
    %v945 = vpop.f32.mrf.mxu0
    %946 = vdwg.mxu0
    %v948 = vsel %vm616, %v897, 0
    %v951 = vsel %vm620, %v898, 0
    %953 = vmatprep.subr.bf16.mxu0 0
    %954 = vmatpush1.bf16.msra.mxu0 0
    %955 = vmatprep.subr.bf16.mxu0 0
    %956 = vmatpush1.bf16.msra.mxu0 0
    %957 = vmatprep.subr.bf16.mxu0 0
    %958 = vmatpush1.bf16.msra.mxu0 0
    %959 = vmatprep.subr.bf16.mxu0 0
    %960 = vmatpush1.bf16.msra.mxu0 0
    %961 = vmatprep.subr.bf16.mxu0 0
    %962 = vmatpush1.bf16.msra.mxu0 0
    %963 = vmatprep.subr.bf16.mxu0 0
    %964 = vmatpush1.bf16.msra.mxu0 0
    %965 = vmatprep.subr.bf16.mxu0 0
    %966 = vmatpush1.bf16.msra.mxu0 0
    %967 = vmatprep.subr.bf16.mxu0 0
    %968 = vmatpush1.bf16.msra.mxu0 %v951
    %969 = vmatprep.subr.bf16.mxu0 0
    %970 = vmatpush2.bf16.msra.mxu0 0
    %971 = vmatprep.subr.bf16.mxu0 0
    %972 = vmatpush2.bf16.msra.mxu0 0
    %973 = vmatprep.subr.bf16.mxu0 0
    %974 = vmatpush2.bf16.msra.mxu0 0
    %975 = vmatprep.subr.bf16.mxu0 0
    %976 = vmatpush2.bf16.msra.mxu0 0
    %977 = vmatprep.subr.bf16.mxu0 0
    %978 = vmatpush2.bf16.msra.mxu0 0
    %979 = vmatprep.subr.bf16.mxu0 0
    %980 = vmatpush2.bf16.msra.mxu0 0
    %981 = vmatprep.subr.bf16.mxu0 0
    %982 = vmatpush2.bf16.msra.mxu0 0
    %983 = vmatprep.subr.bf16.mxu0 0
    %984 = vmatpush2.bf16.msra.mxu0 0
    %985 = vmatprep.mubr.bf16.mxu0 0
    %986 = vmatmul.mubr.bf16.gmra.mxu0 %v948
    %v987 = vpop.f32.mrf.mxu0
    %v988 = vadd.f32 %v942, %v987
    %v989 = vpop.f32.mrf.mxu0
    %v990 = vpop.f32.mrf.mxu0
    %v991 = vpop.f32.mrf.mxu0
    %992 = vdwg.mxu0
    %v993 = vand.u32 %v116, 1
    %vm994 = vcmp.ge.s32.totalorder %v993, 1
    %v995 = vrot.slane %v988, 7
    %v996 = vsel %vm994, %v995, 0.0
    %998 = vrot.lane.b32.xlu0 %v996, 16
    %v999 = vpop.permute.xlu0 %998
    %v1001 = vadd.f32 %v988, %v999
    %vm1002 = vcmp.le.s32.totalorder %v993, 0
    %1004 = vrot.lane.b32.xlu0 %v988, 96
    %v1005 = vpop.permute.xlu0 %1004
    %v1007 = vrot.slane %v1005, 1
    %v1008 = vsel %vm1002, %v1007, 0.0
    %1010 = vrot.lane.b32.xlu0 %v1008, 16
    %v1011 = vpop.permute.xlu0 %1010
    %v1013 = vadd.f32 %v1001, %v1011
    %v1014 = vld [vmem:[%s2 + $0x5] sm:$0x1]
    %v1015 = vlaneseq
    %v1016 = vshrl.u32 %v1015, 7
    %v1017 = vsub.s32 0, %v1016
    %v1018 = vrot.slane %v1014, %v1017
    %1020 = vrot.lane.b32.xlu0 %v1018, 16
    %v1021 = vpop.permute.xlu0 %1020
    %v1023 = vadd.f32 %v1013, %v1021
    %v1024 = vmul.f32 %v1023, 0.2
    %v1025 = vmax.f32 %v1023, %v1024
    %v1026 = vpack.c.bf16 %v1025, %v1025
    %v1027 = vld [vmem:[#allocation2 + $0xc0] sm:$0xf]
    %1029 = vrot.lane.b32.xlu0 %v1026, 112
    %v1030 = vpop.permute.xlu0 %1029
    %v1032 = vsel %vm616, %v1027, 0
    %v1035 = vsel %vm620, %v1030, 0
    %1037 = vmatprep.subr.bf16.mxu0 0
    %1038 = vmatpush1.bf16.msra.mxu0 0
    %1039 = vmatprep.subr.bf16.mxu0 0
    %1040 = vmatpush1.bf16.msra.mxu0 0
    %1041 = vmatprep.subr.bf16.mxu0 0
    %1042 = vmatpush1.bf16.msra.mxu0 0
    %1043 = vmatprep.subr.bf16.mxu0 0
    %1044 = vmatpush1.bf16.msra.mxu0 0
    %1045 = vmatprep.subr.bf16.mxu0 0
    %1046 = vmatpush1.bf16.msra.mxu0 0
    %1047 = vmatprep.subr.bf16.mxu0 0
    %1048 = vmatpush1.bf16.msra.mxu0 0
    %1049 = vmatprep.subr.bf16.mxu0 0
    %1050 = vmatpush1.bf16.msra.mxu0 0
    %1051 = vmatprep.subr.bf16.mxu0 0
    %1052 = vmatpush1.bf16.msra.mxu0 %v1035
    %1053 = vmatprep.subr.bf16.mxu0 0
    %1054 = vmatpush2.bf16.msra.mxu0 0
    %1055 = vmatprep.subr.bf16.mxu0 0
    %1056 = vmatpush2.bf16.msra.mxu0 0
    %1057 = vmatprep.subr.bf16.mxu0 0
    %1058 = vmatpush2.bf16.msra.mxu0 0
    %1059 = vmatprep.subr.bf16.mxu0 0
    %1060 = vmatpush2.bf16.msra.mxu0 0
    %1061 = vmatprep.subr.bf16.mxu0 0
    %1062 = vmatpush2.bf16.msra.mxu0 0
    %1063 = vmatprep.subr.bf16.mxu0 0
    %1064 = vmatpush2.bf16.msra.mxu0 0
    %1065 = vmatprep.subr.bf16.mxu0 0
    %1066 = vmatpush2.bf16.msra.mxu0 0
    %1067 = vmatprep.subr.bf16.mxu0 0
    %1068 = vmatpush2.bf16.msra.mxu0 0
    %1069 = vmatprep.mubr.bf16.mxu0 0
    %1070 = vmatmul.mubr.bf16.gmra.mxu0 %v1032
    %v1071 = vpop.f32.mrf.mxu0
    %v1072 = vadd.f32 0.0, %v1071
    %v1073 = vpop.f32.mrf.mxu0
    %v1074 = vpop.f32.mrf.mxu0
    %v1075 = vpop.f32.mrf.mxu0
    %1076 = vdwg.mxu0
    %v1077 = vpack.c.bf16 %v1072, %v1072
    %v1078 = vld [vmem:[#allocation2 + $0xc8] sm:$0xf]
    %v1079 = vld [vmem:[#allocation2 + $0xd0] sm:$0xf]
    %v1080 = vld [vmem:[#allocation2 + $0xd8] sm:$0xf]
    %v1081 = vld [vmem:[#allocation2 + $0xe0] sm:$0xf]
    %v1082 = vld [vmem:[#allocation2 + $0xe8] sm:$0xf]
    %v1083 = vld [vmem:[#allocation2 + $0xf0] sm:$0xf]
    %v1088 = vunpack.c.l.b16 %v1080
    %v1089 = vunpack.c.l.b16 %v1081
    %v1090 = vunpack.c.l.b16 %v1082
    %v1091 = vunpack.c.l.b16 %v1083
    %v1092 = vpack.c.b16 %v1089, %v1088
    %v1093 = vpack.c.b16 %v1091, %v1090
    %1096 = vmatprep.subr.bf16.mxu0 0
    %1097 = vmatpush1.bf16.msra.mxu0 0
    %1098 = vmatprep.subr.bf16.mxu0 0
    %1099 = vmatpush1.bf16.msra.mxu0 0
    %1100 = vmatprep.subr.bf16.mxu0 0
    %1101 = vmatpush1.bf16.msra.mxu0 0
    %1102 = vmatprep.subr.bf16.mxu0 0
    %1103 = vmatpush1.bf16.msra.mxu0 0
    %1104 = vmatprep.subr.bf16.mxu0 0
    %1105 = vmatpush1.bf16.msra.mxu0 0
    %1106 = vmatprep.subr.bf16.mxu0 0
    %1107 = vmatpush1.bf16.msra.mxu0 0
    %1108 = vmatprep.subr.bf16.mxu0 0
    %1109 = vmatpush1.bf16.msra.mxu0 %v1093
    %1110 = vmatprep.subr.bf16.mxu0 0
    %1111 = vmatpush1.bf16.msra.mxu0 %v1092
    %1112 = vmatprep.subr.bf16.mxu0 0
    %1113 = vmatpush2.bf16.msra.mxu0 0
    %1114 = vmatprep.subr.bf16.mxu0 0
    %1115 = vmatpush2.bf16.msra.mxu0 0
    %1116 = vmatprep.subr.bf16.mxu0 0
    %1117 = vmatpush2.bf16.msra.mxu0 0
    %1118 = vmatprep.subr.bf16.mxu0 0
    %1119 = vmatpush2.bf16.msra.mxu0 0
    %1120 = vmatprep.subr.bf16.mxu0 0
    %1121 = vmatpush2.bf16.msra.mxu0 0
    %1122 = vmatprep.subr.bf16.mxu0 0
    %1123 = vmatpush2.bf16.msra.mxu0 0
    %1124 = vmatprep.subr.bf16.mxu0 0
    %1125 = vmatpush2.bf16.msra.mxu0 0
    %1126 = vmatprep.subr.bf16.mxu0 0
    %1127 = vmatpush2.bf16.msra.mxu0 0
    %1128 = vmatprep.mubr.bf16.mxu0 0
    %1129 = vmatmul.mubr.bf16.gmra.mxu0 %v533
    %v1130 = vpop.f32.mrf.mxu0
    %v1131 = vadd.f32 0.0, %v1130
    %v1132 = vpop.f32.mrf.mxu0
    %v1133 = vpop.f32.mrf.mxu0
    %v1134 = vpop.f32.mrf.mxu0
    %1135 = vdwg.mxu0
    %v1138 = vunpack.c.l.b16 %v1078
    %v1139 = vunpack.c.l.b16 %v1079
    %v1140 = vpack.c.b16 %v1139, %v1138
    %v1143 = vsel %vm469, %v1077, 0
    %1145 = vmatprep.subr.bf16.mxu0 0
    %1146 = vmatpush1.bf16.msra.mxu0 0
    %1147 = vmatprep.subr.bf16.mxu0 0
    %1148 = vmatpush1.bf16.msra.mxu0 0
    %1149 = vmatprep.subr.bf16.mxu0 0
    %1150 = vmatpush1.bf16.msra.mxu0 0
    %1151 = vmatprep.subr.bf16.mxu0 0
    %1152 = vmatpush1.bf16.msra.mxu0 0
    %1153 = vmatprep.subr.bf16.mxu0 0
    %1154 = vmatpush1.bf16.msra.mxu0 0
    %1155 = vmatprep.subr.bf16.mxu0 0
    %1156 = vmatpush1.bf16.msra.mxu0 0
    %1157 = vmatprep.subr.bf16.mxu0 0
    %1158 = vmatpush1.bf16.msra.mxu0 0
    %1159 = vmatprep.subr.bf16.mxu0 0
    %1160 = vmatpush1.bf16.msra.mxu0 %v1140
    %1161 = vmatprep.subr.bf16.mxu0 0
    %1162 = vmatpush2.bf16.msra.mxu0 0
    %1163 = vmatprep.subr.bf16.mxu0 0
    %1164 = vmatpush2.bf16.msra.mxu0 0
    %1165 = vmatprep.subr.bf16.mxu0 0
    %1166 = vmatpush2.bf16.msra.mxu0 0
    %1167 = vmatprep.subr.bf16.mxu0 0
    %1168 = vmatpush2.bf16.msra.mxu0 0
    %1169 = vmatprep.subr.bf16.mxu0 0
    %1170 = vmatpush2.bf16.msra.mxu0 0
    %1171 = vmatprep.subr.bf16.mxu0 0
    %1172 = vmatpush2.bf16.msra.mxu0 0
    %1173 = vmatprep.subr.bf16.mxu0 0
    %1174 = vmatpush2.bf16.msra.mxu0 0
    %1175 = vmatprep.subr.bf16.mxu0 0
    %1176 = vmatpush2.bf16.msra.mxu0 0
    %1177 = vmatprep.mubr.bf16.mxu0 0
    %1178 = vmatmul.mubr.bf16.gmra.mxu0 %v1143
    %v1179 = vpop.f32.mrf.mxu0
    %v1180 = vadd.f32 %v1131, %v1179
    %v1181 = vpop.f32.mrf.mxu0
    %v1182 = vpop.f32.mrf.mxu0
    %v1183 = vpop.f32.mrf.mxu0
    %1184 = vdwg.mxu0
    %vm1185 = vcmp.ge.s32.totalorder %v575, 1
    %v1186 = vrot.slane %v1180, 7
    %v1187 = vsel %vm1185, %v1186, 0.0
    %1189 = vrot.lane.b32.xlu0 %v1187, 32
    %v1190 = vpop.permute.xlu0 %1189
    %v1192 = vadd.f32 %v1180, %v1190
    %vm1193 = vcmp.le.s32.totalorder %v575, 2
    %1195 = vrot.lane.b32.xlu0 %v1180, 64
    %v1196 = vpop.permute.xlu0 %1195
    %v1198 = vrot.slane %v1196, 1
    %v1199 = vsel %vm1193, %v1198, 0.0
    %1201 = vrot.lane.b32.xlu0 %v1199, 32
    %v1202 = vpop.permute.xlu0 %1201
    %v1204 = vadd.f32 %v1192, %v1202
    %v1205 = vld [vmem:[%s2 + $0x6] sm:$0x1]
    %v1206 = vlaneseq
    %v1207 = vshrl.u32 %v1206, 7
    %v1208 = vsub.s32 0, %v1207
    %v1209 = vrot.slane %v1205, %v1208
    %1211 = vrot.lane.b32.xlu0 %v1209, 32
    %v1212 = vpop.permute.xlu0 %1211
    %v1214 = vadd.f32 %v1204, %v1212
    %v1215 = vmul.f32 %v1214, 0.2
    %v1216 = vmax.f32 %v1214, %v1215
    %v1217 = vpack.c.bf16 %v1216, %v1216
    %v1218 = vld [vmem:[#allocation2 + $0xf8] sm:$0xf]
    %v1219 = vld [vmem:[#allocation2 + $0x100] sm:$0xf]
    %v1222 = vunpack.c.l.b16 %v1218
    %v1223 = vunpack.c.l.b16 %v1219
    %v1224 = vpack.c.b16 %v1223, %v1222
    %1226 = vrot.lane.b32.xlu0 %v1217, 96
    %v1227 = vpop.permute.xlu0 %1226
    %v1229 = vsel %vm616, %v1224, 0
    %v1232 = vsel %vm620, %v1227, 0
    %1234 = vmatprep.subr.bf16.mxu0 0
    %1235 = vmatpush1.bf16.msra.mxu0 0
    %1236 = vmatprep.subr.bf16.mxu0 0
    %1237 = vmatpush1.bf16.msra.mxu0 0
    %1238 = vmatprep.subr.bf16.mxu0 0
    %1239 = vmatpush1.bf16.msra.mxu0 0
    %1240 = vmatprep.subr.bf16.mxu0 0
    %1241 = vmatpush1.bf16.msra.mxu0 0
    %1242 = vmatprep.subr.bf16.mxu0 0
    %1243 = vmatpush1.bf16.msra.mxu0 0
    %1244 = vmatprep.subr.bf16.mxu0 0
    %1245 = vmatpush1.bf16.msra.mxu0 0
    %1246 = vmatprep.subr.bf16.mxu0 0
    %1247 = vmatpush1.bf16.msra.mxu0 0
    %1248 = vmatprep.subr.bf16.mxu0 0
    %1249 = vmatpush1.bf16.msra.mxu0 %v1232
    %1250 = vmatprep.subr.bf16.mxu0 0
    %1251 = vmatpush2.bf16.msra.mxu0 0
    %1252 = vmatprep.subr.bf16.mxu0 0
    %1253 = vmatpush2.bf16.msra.mxu0 0
    %1254 = vmatprep.subr.bf16.mxu0 0
    %1255 = vmatpush2.bf16.msra.mxu0 0
    %1256 = vmatprep.subr.bf16.mxu0 0
    %1257 = vmatpush2.bf16.msra.mxu0 0
    %1258 = vmatprep.subr.bf16.mxu0 0
    %1259 = vmatpush2.bf16.msra.mxu0 0
    %1260 = vmatprep.subr.bf16.mxu0 0
    %1261 = vmatpush2.bf16.msra.mxu0 0
    %1262 = vmatprep.subr.bf16.mxu0 0
    %1263 = vmatpush2.bf16.msra.mxu0 0
    %1264 = vmatprep.subr.bf16.mxu0 0
    %1265 = vmatpush2.bf16.msra.mxu0 0
    %1266 = vmatprep.mubr.bf16.mxu0 0
    %1267 = vmatmul.mubr.bf16.gmra.mxu0 %v1229
    %v1268 = vpop.f32.mrf.mxu0
    %v1269 = vadd.f32 0.0, %v1268
    %v1270 = vpop.f32.mrf.mxu0
    %v1271 = vpop.f32.mrf.mxu0
    %v1272 = vadd.f32 0.0, %v1271
    %v1273 = vpop.f32.mrf.mxu0
    %1274 = vdwg.mxu0
    %v1275 = vpack.c.bf16 %v1272, %v1269
    %v1276 = vld [vmem:[#allocation2 + $0x108] sm:$0xff]
    %v1277 = vld [vmem:[#allocation2 + $0x110] sm:$0xff]
    %v1278 = vld [vmem:[#allocation2 + $0x118] sm:$0xff]
    %v1279 = vld [vmem:[#allocation2 + $0x120] sm:$0xff]
    %v1280 = vld [vmem:[#allocation2 + $0x128] sm:$0xff]
    %v1281 = vld [vmem:[#allocation2 + $0x130] sm:$0xff]
    %v1282 = vld [vmem:[#allocation2 + $0x138] sm:$0xff]
    %v1283 = vld [vmem:[#allocation2 + $0x140] sm:$0xff]
    %v1288 = vunpack.c.l.b16 %v1280
    %v1289 = vunpack.c.h.b16 %v1280
    %v1290 = vunpack.c.l.b16 %v1281
    %v1291 = vunpack.c.h.b16 %v1281
    %v1292 = vunpack.c.l.b16 %v1282
    %v1293 = vunpack.c.h.b16 %v1282
    %v1294 = vunpack.c.l.b16 %v1283
    %v1295 = vunpack.c.h.b16 %v1283
    %v1296 = vpack.c.b16 %v1290, %v1288
    %v1297 = vpack.c.b16 %v1291, %v1289
    %v1298 = vpack.c.b16 %v1294, %v1292
    %v1299 = vpack.c.b16 %v1295, %v1293
    %1304 = vmatprep.subr.bf16.mxu0 0
    %1305 = vmatpush1.bf16.msra.mxu0 0
    %1306 = vmatprep.subr.bf16.mxu0 0
    %1307 = vmatpush1.bf16.msra.mxu0 0
    %1308 = vmatprep.subr.bf16.mxu0 0
    %1309 = vmatpush1.bf16.msra.mxu0 0
    %1310 = vmatprep.subr.bf16.mxu0 0
    %1311 = vmatpush1.bf16.msra.mxu0 0
    %1312 = vmatprep.subr.bf16.mxu0 0
    %1313 = vmatpush1.bf16.msra.mxu0 0
    %1314 = vmatprep.subr.bf16.mxu0 0
    %1315 = vmatpush1.bf16.msra.mxu0 0
    %1316 = vmatprep.subr.bf16.mxu0 %v1299
    %1317 = vmatpush1.bf16.msra.mxu0 %v1298
    %1318 = vmatprep.subr.bf16.mxu0 %v1297
    %1319 = vmatpush1.bf16.msra.mxu0 %v1296
    %1320 = vmatprep.subr.bf16.mxu0 0
    %1321 = vmatpush2.bf16.msra.mxu0 0
    %1322 = vmatprep.subr.bf16.mxu0 0
    %1323 = vmatpush2.bf16.msra.mxu0 0
    %1324 = vmatprep.subr.bf16.mxu0 0
    %1325 = vmatpush2.bf16.msra.mxu0 0
    %1326 = vmatprep.subr.bf16.mxu0 0
    %1327 = vmatpush2.bf16.msra.mxu0 0
    %1328 = vmatprep.subr.bf16.mxu0 0
    %1329 = vmatpush2.bf16.msra.mxu0 0
    %1330 = vmatprep.subr.bf16.mxu0 0
    %1331 = vmatpush2.bf16.msra.mxu0 0
    %1332 = vmatprep.subr.bf16.mxu0 0
    %1333 = vmatpush2.bf16.msra.mxu0 0
    %1334 = vmatprep.subr.bf16.mxu0 0
    %1335 = vmatpush2.bf16.msra.mxu0 0
    %1336 = vmatprep.mubr.bf16.mxu0 0
    %1337 = vmatmul.mubr.bf16.gmra.mxu0 %v347
    %v1338 = vpop.f32.mrf.mxu0
    %v1339 = vadd.f32 0.0, %v1338
    %v1340 = vpop.f32.mrf.mxu0
    %v1341 = vadd.f32 0.0, %v1340
    %v1342 = vpop.f32.mrf.mxu0
    %v1343 = vadd.f32 0.0, %v1342
    %v1344 = vpop.f32.mrf.mxu0
    %v1345 = vadd.f32 0.0, %v1344
    %1346 = vdwg.mxu0
    %v1351 = vunpack.c.l.b16 %v1276
    %v1352 = vunpack.c.h.b16 %v1276
    %v1353 = vunpack.c.l.b16 %v1277
    %v1354 = vunpack.c.h.b16 %v1277
    %v1355 = vunpack.c.l.b16 %v1278
    %v1356 = vunpack.c.h.b16 %v1278
    %v1357 = vunpack.c.l.b16 %v1279
    %v1358 = vunpack.c.h.b16 %v1279
    %v1359 = vpack.c.b16 %v1353, %v1351
    %v1360 = vpack.c.b16 %v1354, %v1352
    %v1361 = vpack.c.b16 %v1357, %v1355
    %v1362 = vpack.c.b16 %v1358, %v1356
    %v1368 = vsel %vm59, %v1275, 0
    %1370 = vmatprep.subr.bf16.mxu0 0
    %1371 = vmatpush1.bf16.msra.mxu0 0
    %1372 = vmatprep.subr.bf16.mxu0 0
    %1373 = vmatpush1.bf16.msra.mxu0 0
    %1374 = vmatprep.subr.bf16.mxu0 0
    %1375 = vmatpush1.bf16.msra.mxu0 0
    %1376 = vmatprep.subr.bf16.mxu0 0
    %1377 = vmatpush1.bf16.msra.mxu0 0
    %1378 = vmatprep.subr.bf16.mxu0 0
    %1379 = vmatpush1.bf16.msra.mxu0 0
    %1380 = vmatprep.subr.bf16.mxu0 0
    %1381 = vmatpush1.bf16.msra.mxu0 0
    %1382 = vmatprep.subr.bf16.mxu0 %v1362
    %1383 = vmatpush1.bf16.msra.mxu0 %v1361
    %1384 = vmatprep.subr.bf16.mxu0 %v1360
    %1385 = vmatpush1.bf16.msra.mxu0 %v1359
    %1386 = vmatprep.subr.bf16.mxu0 0
    %1387 = vmatpush2.bf16.msra.mxu0 0
    %1388 = vmatprep.subr.bf16.mxu0 0
    %1389 = vmatpush2.bf16.msra.mxu0 0
    %1390 = vmatprep.subr.bf16.mxu0 0
    %1391 = vmatpush2.bf16.msra.mxu0 0
    %1392 = vmatprep.subr.bf16.mxu0 0
    %1393 = vmatpush2.bf16.msra.mxu0 0
    %1394 = vmatprep.subr.bf16.mxu0 0
    %1395 = vmatpush2.bf16.msra.mxu0 0
    %1396 = vmatprep.subr.bf16.mxu0 0
    %1397 = vmatpush2.bf16.msra.mxu0 0
    %1398 = vmatprep.subr.bf16.mxu0 0
    %1399 = vmatpush2.bf16.msra.mxu0 0
    %1400 = vmatprep.subr.bf16.mxu0 0
    %1401 = vmatpush2.bf16.msra.mxu0 0
    %1402 = vmatprep.mubr.bf16.mxu0 0
    %1403 = vmatmul.mubr.bf16.gmra.mxu0 %v1368
    %v1404 = vpop.f32.mrf.mxu0
    %v1405 = vadd.f32 %v1339, %v1404
    %v1406 = vpop.f32.mrf.mxu0
    %v1407 = vadd.f32 %v1341, %v1406
    %v1408 = vpop.f32.mrf.mxu0
    %v1409 = vadd.f32 %v1343, %v1408
    %v1410 = vpop.f32.mrf.mxu0
    %v1411 = vadd.f32 %v1345, %v1410
    %1412 = vdwg.mxu0
    %vm1413 = vcmp.ge.s32.totalorder %v390, 1
    %vm1414 = vcmp.ge.s32.totalorder %v391, 1
    %v1415 = vrot.slane %v1405, 7
    %v1416 = vrot.slane %v1409, 7
    %vm1417 = vcmp.lt.s32.totalorder %v116, 1
    %v1418 = vsel %vm1417, %v1415, %v1416
    %v1419 = vsel %vm1417, %v1416, %v1415
    %v1420 = vsel %vm1413, %v1419, 0.0
    %v1421 = vsel %vm1414, %v1418, 0.0
    %1424 = vrot.lane.b32.xlu0 %v1420, 64
    %v1425 = vpop.permute.xlu0 %1424
    %1426 = vrot.lane.b32.xlu0 %v1421, 64
    %v1427 = vpop.permute.xlu0 %1426
    %v1430 = vadd.f32 %v1405, %v1425
    %v1431 = vadd.f32 %v1409, %v1427
    %vm1432 = vcmp.le.s32.totalorder %v390, 6
    %vm1433 = vcmp.le.s32.totalorder %v391, 6
    %v1434 = vrot.slane %v1407, 1
    %v1435 = vrot.slane %v1411, 1
    %v1436 = vsel %vm234, %v1434, %v1435
    %v1437 = vsel %vm234, %v1435, %v1434
    %v1438 = vsel %vm1432, %v1436, 0.0
    %v1439 = vsel %vm1433, %v1437, 0.0
    %1442 = vrot.lane.b32.xlu0 %v1438, 64
    %v1443 = vpop.permute.xlu0 %1442
    %1444 = vrot.lane.b32.xlu0 %v1439, 64
    %v1445 = vpop.permute.xlu0 %1444
    %v1448 = vadd.f32 %v1430, %v1443
    %v1449 = vadd.f32 %v1431, %v1445
    %v1450 = vld [vmem:[%s2 + $0x7] sm:$0x1]
    %v1451 = vlaneseq
    %v1452 = vshrl.u32 %v1451, 7
    %v1453 = vsub.s32 0, %v1452
    %v1454 = vrot.slane %v1450, %v1453
    %1456 = vrot.lane.b32.xlu0 %v1454, 64
    %v1457 = vpop.permute.xlu0 %1456
    %v1459 = vadd.f32 %v1448, %v1457
    %v1460 = vadd.f32 %v1449, %v1457
    %v1461 = vmul.f32 %v1459, 0.2
    %v1462 = vmul.f32 %v1460, 0.2
    %v1463 = vmax.f32 %v1459, %v1461
    %v1464 = vmax.f32 %v1460, %v1462
    %v1465 = vpack.c.bf16 %v1464, %v1463
    %v1466 = vld [vmem:[#allocation2 + $0x148] sm:$0xff]
    %v1467 = vld [vmem:[#allocation2 + $0x150] sm:$0xff]
    %v1468 = vld [vmem:[#allocation2 + $0x158] sm:$0xff]
    %v1469 = vld [vmem:[#allocation2 + $0x160] sm:$0xff]
    %v1470 = vld [vmem:[#allocation2 + $0x168] sm:$0xff]
    %v1471 = vld [vmem:[#allocation2 + $0x170] sm:$0xff]
    %v1472 = vld [vmem:[#allocation2 + $0x178] sm:$0xff]
    %v1473 = vld [vmem:[#allocation2 + $0x180] sm:$0xff]
    %1475 = vrot.lane.b32.xlu0 %v1465, 64
    %v1476 = vpop.permute.xlu0 %1475
    %v1485 = vunpack.c.l.b16 %v1466
    %v1486 = vunpack.c.h.b16 %v1466
    %v1487 = vunpack.c.l.b16 %v1467
    %v1488 = vunpack.c.h.b16 %v1467
    %v1489 = vunpack.c.l.b16 %v1468
    %v1490 = vunpack.c.h.b16 %v1468
    %v1491 = vunpack.c.l.b16 %v1469
    %v1492 = vunpack.c.h.b16 %v1469
    %v1493 = vunpack.c.l.b16 %v1470
    %v1494 = vunpack.c.h.b16 %v1470
    %v1495 = vunpack.c.l.b16 %v1471
    %v1496 = vunpack.c.h.b16 %v1471
    %v1497 = vunpack.c.l.b16 %v1472
    %v1498 = vunpack.c.h.b16 %v1472
    %v1499 = vunpack.c.l.b16 %v1473
    %v1500 = vunpack.c.h.b16 %v1473
    %v1501 = vpack.c.b16 %v1487, %v1485
    %v1502 = vpack.c.b16 %v1488, %v1486
    %v1503 = vpack.c.b16 %v1491, %v1489
    %v1504 = vpack.c.b16 %v1492, %v1490
    %v1505 = vpack.c.b16 %v1495, %v1493
    %v1506 = vpack.c.b16 %v1496, %v1494
    %v1507 = vpack.c.b16 %v1499, %v1497
    %v1508 = vpack.c.b16 %v1500, %v1498
    %vm1517 = vcmask 523264
    %v1519 = vsel %vm1517, %v1476, 0
    %1521 = vmatprep.subr.bf16.mxu0 0
    %1522 = vmatpush1.bf16.msra.mxu0 0
    %1523 = vmatprep.subr.bf16.mxu0 0
    %1524 = vmatpush1.bf16.msra.mxu0 0
    %1525 = vmatprep.subr.bf16.mxu0 0
    %1526 = vmatpush1.bf16.msra.mxu0 0
    %1527 = vmatprep.subr.bf16.mxu0 0
    %1528 = vmatpush1.bf16.msra.mxu0 0
    %1529 = vmatprep.subr.bf16.mxu0 %v1508
    %1530 = vmatpush1.bf16.msra.mxu0 %v1507
    %1531 = vmatprep.subr.bf16.mxu0 %v1506
    %1532 = vmatpush1.bf16.msra.mxu0 %v1505
    %1533 = vmatprep.subr.bf16.mxu0 %v1504
    %1534 = vmatpush1.bf16.msra.mxu0 %v1503
    %1535 = vmatprep.subr.bf16.mxu0 %v1502
    %1536 = vmatpush1.bf16.msra.mxu0 %v1501
    %1537 = vmatprep.subr.bf16.mxu0 0
    %1538 = vmatpush2.bf16.msra.mxu0 0
    %1539 = vmatprep.subr.bf16.mxu0 0
    %1540 = vmatpush2.bf16.msra.mxu0 0
    %1541 = vmatprep.subr.bf16.mxu0 0
    %1542 = vmatpush2.bf16.msra.mxu0 0
    %1543 = vmatprep.subr.bf16.mxu0 0
    %1544 = vmatpush2.bf16.msra.mxu0 0
    %1545 = vmatprep.subr.bf16.mxu0 0
    %1546 = vmatpush2.bf16.msra.mxu0 0
    %1547 = vmatprep.subr.bf16.mxu0 0
    %1548 = vmatpush2.bf16.msra.mxu0 0
    %1549 = vmatprep.subr.bf16.mxu0 0
    %1550 = vmatpush2.bf16.msra.mxu0 0
    %1551 = vmatprep.subr.bf16.mxu0 0
    %1552 = vmatpush2.bf16.msra.mxu0 0
    %1553 = vmatprep.mubr.bf16.mxu0 0
    %1554 = vmatmul.mubr.bf16.gmra.mxu0 %v1519
    %v1555 = vpop.f32.mrf.mxu0
    %v1556 = vadd.f32 0.0, %v1555
    %v1557 = vpop.f32.mrf.mxu0
    %v1558 = vadd.f32 0.0, %v1557
    %v1559 = vpop.f32.mrf.mxu0
    %v1560 = vadd.f32 0.0, %v1559
    %v1561 = vpop.f32.mrf.mxu0
    %v1562 = vadd.f32 0.0, %v1561
    %1563 = vdwg.mxu0
    %v1564 = vrot.slane %v1556, 7
    %v1565 = vrot.slane %v1560, 7
    %v1566 = vsel %vm1417, %v1564, %v1565
    %v1567 = vsel %vm1417, %v1565, %v1564
    %v1568 = vsel %vm1413, %v1567, 0.0
    %v1569 = vsel %vm1414, %v1566, 0.0
    %1572 = vrot.lane.b32.xlu0 %v1568, 64
    %v1573 = vpop.permute.xlu0 %1572
    %1574 = vrot.lane.b32.xlu0 %v1569, 64
    %v1575 = vpop.permute.xlu0 %1574
    %v1578 = vadd.f32 %v1556, %v1573
    %v1579 = vadd.f32 %v1560, %v1575
    %v1580 = vrot.slane %v1558, 1
    %v1581 = vrot.slane %v1562, 1
    %v1582 = vsel %vm234, %v1580, %v1581
    %v1583 = vsel %vm234, %v1581, %v1580
    %v1584 = vsel %vm1432, %v1582, 0.0
    %v1585 = vsel %vm1433, %v1583, 0.0
    %1588 = vrot.lane.b32.xlu0 %v1584, 64
    %v1589 = vpop.permute.xlu0 %1588
    %1590 = vrot.lane.b32.xlu0 %v1585, 64
    %v1591 = vpop.permute.xlu0 %1590
    %v1594 = vadd.f32 %v1578, %v1589
    %v1595 = vadd.f32 %v1579, %v1591
    %v1596 = vld [vmem:[%s2 + $0x8] sm:$0x1]
    %v1597 = vlaneseq
    %v1598 = vshrl.u32 %v1597, 7
    %v1599 = vsub.s32 0, %v1598
    %v1600 = vrot.slane %v1596, %v1599
    %1602 = vrot.lane.b32.xlu0 %v1600, 64
    %v1603 = vpop.permute.xlu0 %1602
    %v1605 = vadd.f32 %v1594, %v1603
    %v1606 = vadd.f32 %v1595, %v1603
    %v1607 = vmul.f32 %v1605, 0.2
    %v1608 = vmul.f32 %v1606, 0.2
    %v1609 = vmax.f32 %v1605, %v1607
    %v1610 = vmax.f32 %v1606, %v1608
    %v1611 = vpack.c.bf16 %v1610, %v1609
    %v1612 = vld [vmem:[#allocation2 + $0x188] sm:$0xf]
    %v1613 = vld [vmem:[#allocation2 + $0x190] sm:$0xf]
    %v1614 = vld [vmem:[#allocation2 + $0x198] sm:$0xf]
    %v1615 = vld [vmem:[#allocation2 + $0x1a0] sm:$0xf]
    %v1620 = vunpack.c.l.b16 %v1612
    %v1621 = vunpack.c.l.b16 %v1613
    %v1622 = vunpack.c.l.b16 %v1614
    %v1623 = vunpack.c.l.b16 %v1615
    %v1624 = vpack.c.b16 %v1621, %v1620
    %v1625 = vpack.c.b16 %v1623, %v1622
    %1627 = vrot.lane.b32.xlu0 %v1611, 64
    %v1628 = vpop.permute.xlu0 %1627
    %v1631 = vsel %vm469, %v1624, 0
    %v1634 = vsel %vm469, %v1625, 0
    %1636 = vmatprep.subr.bf16.mxu0 0
    %1637 = vmatpush1.bf16.msra.mxu0 0
    %1638 = vmatprep.subr.bf16.mxu0 0
    %1639 = vmatpush1.bf16.msra.mxu0 0
    %1640 = vmatprep.subr.bf16.mxu0 0
    %1641 = vmatpush1.bf16.msra.mxu0 0
    %1642 = vmatprep.subr.bf16.mxu0 0
    %1643 = vmatpush1.bf16.msra.mxu0 0
    %1644 = vmatprep.subr.bf16.mxu0 0
    %1645 = vmatpush1.bf16.msra.mxu0 0
    %1646 = vmatprep.subr.bf16.mxu0 0
    %1647 = vmatpush1.bf16.msra.mxu0 0
    %1648 = vmatprep.subr.bf16.mxu0 0
    %1649 = vmatpush1.bf16.msra.mxu0 0
    %1650 = vmatprep.subr.bf16.mxu0 0
    %1651 = vmatpush1.bf16.msra.mxu0 %v1628
    %1652 = vmatprep.subr.bf16.mxu0 0
    %1653 = vmatpush2.bf16.msra.mxu0 0
    %1654 = vmatprep.subr.bf16.mxu0 0
    %1655 = vmatpush2.bf16.msra.mxu0 0
    %1656 = vmatprep.subr.bf16.mxu0 0
    %1657 = vmatpush2.bf16.msra.mxu0 0
    %1658 = vmatprep.subr.bf16.mxu0 0
    %1659 = vmatpush2.bf16.msra.mxu0 0
    %1660 = vmatprep.subr.bf16.mxu0 0
    %1661 = vmatpush2.bf16.msra.mxu0 0
    %1662 = vmatprep.subr.bf16.mxu0 0
    %1663 = vmatpush2.bf16.msra.mxu0 0
    %1664 = vmatprep.subr.bf16.mxu0 0
    %1665 = vmatpush2.bf16.msra.mxu0 0
    %1666 = vmatprep.subr.bf16.mxu0 0
    %1667 = vmatpush2.bf16.msra.mxu0 0
    %1668 = vmatprep.mubr.bf16.mxu0 0
    %1669 = vmatmul.mubr.bf16.gmra.mxu0 %v1631
    %v1670 = vpop.f32.mrf.mxu0
    %v1671 = vadd.f32 0.0, %v1670
    %v1672 = vpop.f32.mrf.mxu0
    %v1673 = vpop.f32.mrf.mxu0
    %v1674 = vadd.f32 0.0, %v1673
    %v1675 = vpop.f32.mrf.mxu0
    %1676 = vmatprep.mubr.bf16.mxu0 0
    %1677 = vmatmul.mubr.bf16.gmra.mxu0 %v1634
    %v1678 = vpop.f32.mrf.mxu0
    %v1679 = vadd.f32 0.0, %v1678
    %v1680 = vpop.f32.mrf.mxu0
    %v1681 = vpop.f32.mrf.mxu0
    %v1682 = vadd.f32 0.0, %v1681
    %v1683 = vpop.f32.mrf.mxu0
    %1684 = vdwg.mxu0
    %v1685 = vpack.c.bf16 %v1674, %v1671
    %v1686 = vpack.c.bf16 %v1682, %v1679
    %v1687 = vld [vmem:[#allocation2 + $0x1a8] sm:$0xff]
    %v1688 = vld [vmem:[#allocation2 + $0x1b0] sm:$0xff]
    %v1689 = vld [vmem:[#allocation2 + $0x1b8] sm:$0xff]
    %v1690 = vld [vmem:[#allocation2 + $0x1c0] sm:$0xff]
    %v1691 = vld [vmem:[#allocation2 + $0x1c8] sm:$0xff]
    %v1692 = vld [vmem:[#allocation2 + $0x1d0] sm:$0xff]
    %v1693 = vld [vmem:[#allocation2 + $0x1d8] sm:$0xff]
    %v1694 = vld [vmem:[#allocation2 + $0x1e0] sm:$0xff]
    %v1695 = vld [vmem:[#allocation2 + $0x1e8] sm:$0xff]
    %v1696 = vld [vmem:[#allocation2 + $0x1f0] sm:$0xff]
    %v1697 = vld [vmem:[#allocation2 + $0x1f8] sm:$0xff]
    %v1698 = vld [vmem:[#allocation2 + $0x200] sm:$0xff]
    %v1703 = vunpack.c.l.b16 %v1695
    %v1704 = vunpack.c.h.b16 %v1695
    %v1705 = vunpack.c.l.b16 %v1696
    %v1706 = vunpack.c.h.b16 %v1696
    %v1707 = vunpack.c.l.b16 %v1697
    %v1708 = vunpack.c.h.b16 %v1697
    %v1709 = vunpack.c.l.b16 %v1698
    %v1710 = vunpack.c.h.b16 %v1698
    %v1711 = vpack.c.b16 %v1705, %v1703
    %v1712 = vpack.c.b16 %v1706, %v1704
    %v1713 = vpack.c.b16 %v1709, %v1707
    %v1714 = vpack.c.b16 %v1710, %v1708
    %1719 = vmatprep.subr.bf16.mxu0 0
    %1720 = vmatpush1.bf16.msra.mxu0 0
    %1721 = vmatprep.subr.bf16.mxu0 0
    %1722 = vmatpush1.bf16.msra.mxu0 0
    %1723 = vmatprep.subr.bf16.mxu0 0
    %1724 = vmatpush1.bf16.msra.mxu0 0
    %1725 = vmatprep.subr.bf16.mxu0 0
    %1726 = vmatpush1.bf16.msra.mxu0 0
    %1727 = vmatprep.subr.bf16.mxu0 0
    %1728 = vmatpush1.bf16.msra.mxu0 0
    %1729 = vmatprep.subr.bf16.mxu0 0
    %1730 = vmatpush1.bf16.msra.mxu0 0
    %1731 = vmatprep.subr.bf16.mxu0 %v1714
    %1732 = vmatpush1.bf16.msra.mxu0 %v1713
    %1733 = vmatprep.subr.bf16.mxu0 %v1712
    %1734 = vmatpush1.bf16.msra.mxu0 %v1711
    %1735 = vmatprep.subr.bf16.mxu0 0
    %1736 = vmatpush2.bf16.msra.mxu0 0
    %1737 = vmatprep.subr.bf16.mxu0 0
    %1738 = vmatpush2.bf16.msra.mxu0 0
    %1739 = vmatprep.subr.bf16.mxu0 0
    %1740 = vmatpush2.bf16.msra.mxu0 0
    %1741 = vmatprep.subr.bf16.mxu0 0
    %1742 = vmatpush2.bf16.msra.mxu0 0
    %1743 = vmatprep.subr.bf16.mxu0 0
    %1744 = vmatpush2.bf16.msra.mxu0 0
    %1745 = vmatprep.subr.bf16.mxu0 0
    %1746 = vmatpush2.bf16.msra.mxu0 0
    %1747 = vmatprep.subr.bf16.mxu0 0
    %1748 = vmatpush2.bf16.msra.mxu0 0
    %1749 = vmatprep.subr.bf16.mxu0 0
    %1750 = vmatpush2.bf16.msra.mxu0 0
    %1751 = vmatprep.mubr.bf16.mxu0 0
    %1752 = vmatmul.mubr.bf16.gmra.mxu0 %v61
    %v1753 = vpop.f32.mrf.mxu0
    %v1754 = vadd.f32 0.0, %v1753
    %v1755 = vpop.f32.mrf.mxu0
    %v1756 = vadd.f32 0.0, %v1755
    %v1757 = vpop.f32.mrf.mxu0
    %v1758 = vadd.f32 0.0, %v1757
    %v1759 = vpop.f32.mrf.mxu0
    %v1760 = vadd.f32 0.0, %v1759
    %1761 = vmatprep.mubr.bf16.mxu0 0
    %1762 = vmatmul.mubr.bf16.gmra.mxu0 %v64
    %v1763 = vpop.f32.mrf.mxu0
    %v1764 = vadd.f32 0.0, %v1763
    %v1765 = vpop.f32.mrf.mxu0
    %v1766 = vadd.f32 0.0, %v1765
    %v1767 = vpop.f32.mrf.mxu0
    %v1768 = vadd.f32 0.0, %v1767
    %v1769 = vpop.f32.mrf.mxu0
    %v1770 = vadd.f32 0.0, %v1769
    %1771 = vdwg.mxu0
    %v1780 = vunpack.c.l.b16 %v1687
    %v1781 = vunpack.c.h.b16 %v1687
    %v1782 = vunpack.c.l.b16 %v1688
    %v1783 = vunpack.c.h.b16 %v1688
    %v1784 = vunpack.c.l.b16 %v1689
    %v1785 = vunpack.c.h.b16 %v1689
    %v1786 = vunpack.c.l.b16 %v1690
    %v1787 = vunpack.c.h.b16 %v1690
    %v1788 = vunpack.c.l.b16 %v1691
    %v1789 = vunpack.c.h.b16 %v1691
    %v1790 = vunpack.c.l.b16 %v1692
    %v1791 = vunpack.c.h.b16 %v1692
    %v1792 = vunpack.c.l.b16 %v1693
    %v1793 = vunpack.c.h.b16 %v1693
    %v1794 = vunpack.c.l.b16 %v1694
    %v1795 = vunpack.c.h.b16 %v1694
    %v1796 = vpack.c.b16 %v1782, %v1780
    %v1797 = vpack.c.b16 %v1783, %v1781
    %v1798 = vpack.c.b16 %v1786, %v1784
    %v1799 = vpack.c.b16 %v1787, %v1785
    %v1800 = vpack.c.b16 %v1790, %v1788
    %v1801 = vpack.c.b16 %v1791, %v1789
    %v1802 = vpack.c.b16 %v1794, %v1792
    %v1803 = vpack.c.b16 %v1795, %v1793
    %v1813 = vsel %vm1517, %v1685, 0
    %v1816 = vsel %vm1517, %v1686, 0
    %1818 = vmatprep.subr.bf16.mxu0 0
    %1819 = vmatpush1.bf16.msra.mxu0 0
    %1820 = vmatprep.subr.bf16.mxu0 0
    %1821 = vmatpush1.bf16.msra.mxu0 0
    %1822 = vmatprep.subr.bf16.mxu0 0
    %1823 = vmatpush1.bf16.msra.mxu0 0
    %1824 = vmatprep.subr.bf16.mxu0 0
    %1825 = vmatpush1.bf16.msra.mxu0 0
    %1826 = vmatprep.subr.bf16.mxu0 %v1803
    %1827 = vmatpush1.bf16.msra.mxu0 %v1802
    %1828 = vmatprep.subr.bf16.mxu0 %v1801
    %1829 = vmatpush1.bf16.msra.mxu0 %v1800
    %1830 = vmatprep.subr.bf16.mxu0 %v1799
    %1831 = vmatpush1.bf16.msra.mxu0 %v1798
    %1832 = vmatprep.subr.bf16.mxu0 %v1797
    %1833 = vmatpush1.bf16.msra.mxu0 %v1796
    %1834 = vmatprep.subr.bf16.mxu0 0
    %1835 = vmatpush2.bf16.msra.mxu0 0
    %1836 = vmatprep.subr.bf16.mxu0 0
    %1837 = vmatpush2.bf16.msra.mxu0 0
    %1838 = vmatprep.subr.bf16.mxu0 0
    %1839 = vmatpush2.bf16.msra.mxu0 0
    %1840 = vmatprep.subr.bf16.mxu0 0
    %1841 = vmatpush2.bf16.msra.mxu0 0
    %1842 = vmatprep.subr.bf16.mxu0 0
    %1843 = vmatpush2.bf16.msra.mxu0 0
    %1844 = vmatprep.subr.bf16.mxu0 0
    %1845 = vmatpush2.bf16.msra.mxu0 0
    %1846 = vmatprep.subr.bf16.mxu0 0
    %1847 = vmatpush2.bf16.msra.mxu0 0
    %1848 = vmatprep.subr.bf16.mxu0 0
    %1849 = vmatpush2.bf16.msra.mxu0 0
    %1850 = vmatprep.mubr.bf16.mxu0 0
    %1851 = vmatmul.mubr.bf16.gmra.mxu0 %v1813
    %v1852 = vpop.f32.mrf.mxu0
    %v1853 = vadd.f32 %v1754, %v1852
    %v1854 = vpop.f32.mrf.mxu0
    %v1855 = vadd.f32 %v1756, %v1854
    %v1856 = vpop.f32.mrf.mxu0
    %v1857 = vadd.f32 %v1758, %v1856
    %v1858 = vpop.f32.mrf.mxu0
    %v1859 = vadd.f32 %v1760, %v1858
    %1860 = vmatprep.mubr.bf16.mxu0 0
    %1861 = vmatmul.mubr.bf16.gmra.mxu0 %v1816
    %v1862 = vpop.f32.mrf.mxu0
    %v1863 = vadd.f32 %v1764, %v1862
    %v1864 = vpop.f32.mrf.mxu0
    %v1865 = vadd.f32 %v1766, %v1864
    %v1866 = vpop.f32.mrf.mxu0
    %v1867 = vadd.f32 %v1768, %v1866
    %v1868 = vpop.f32.mrf.mxu0
    %v1869 = vadd.f32 %v1770, %v1868
    %1870 = vdwg.mxu0
    %vm1871 = vcmp.ge.s32.totalorder %v120, 1
    %vm1872 = vcmp.ge.s32.totalorder %v121, 1
    %vm1873 = vcmp.ge.s32.totalorder %v122, 1
    %vm1874 = vcmp.ge.s32.totalorder %v123, 1
    %v1875 = vrot.slane %v1853, 7
    %v1876 = vrot.slane %v1857, 7
    %v1877 = vrot.slane %v1863, 7
    %v1878 = vrot.slane %v1867, 7
    %v1879 = vsel %vm1417, %v1877, %v1878
    %v1880 = vsel %vm1417, %v1876, %v1877
    %v1881 = vsel %vm1417, %v1875, %v1876
    %v1882 = vsel %vm1417, %v1878, %v1875
    %v1883 = vsel %vm1871, %v1882, 0.0
    %v1884 = vsel %vm1872, %v1881, 0.0
    %v1885 = vsel %vm1873, %v1880, 0.0
    %v1886 = vsel %vm1874, %v1879, 0.0
    %1891 = vrot.lane.b32.xlu0 %v1883, 64
    %v1892 = vpop.permute.xlu0 %1891
    %1893 = vrot.lane.b32.xlu0 %v1884, 64
    %v1894 = vpop.permute.xlu0 %1893
    %1895 = vrot.lane.b32.xlu0 %v1885, 64
    %v1896 = vpop.permute.xlu0 %1895
    %1897 = vrot.lane.b32.xlu0 %v1886, 64
    %v1898 = vpop.permute.xlu0 %1897
    %v1903 = vadd.f32 %v1853, %v1892
    %v1904 = vadd.f32 %v1857, %v1894
    %v1905 = vadd.f32 %v1863, %v1896
    %v1906 = vadd.f32 %v1867, %v1898
    %vm1907 = vcmp.le.s32.totalorder %v120, 14
    %vm1908 = vcmp.le.s32.totalorder %v121, 14
    %vm1909 = vcmp.le.s32.totalorder %v122, 14
    %vm1910 = vcmp.le.s32.totalorder %v123, 14
    %v1911 = vrot.slane %v1855, 1
    %v1912 = vrot.slane %v1859, 1
    %v1913 = vrot.slane %v1865, 1
    %v1914 = vrot.slane %v1869, 1
    %v1915 = vsel %vm234, %v1913, %v1914
    %v1916 = vsel %vm234, %v1912, %v1913
    %v1917 = vsel %vm234, %v1911, %v1912
    %v1918 = vsel %vm234, %v1914, %v1911
    %v1919 = vsel %vm1907, %v1917, 0.0
    %v1920 = vsel %vm1908, %v1916, 0.0
    %v1921 = vsel %vm1909, %v1915, 0.0
    %v1922 = vsel %vm1910, %v1918, 0.0
    %1927 = vrot.lane.b32.xlu0 %v1919, 64
    %v1928 = vpop.permute.xlu0 %1927
    %1929 = vrot.lane.b32.xlu0 %v1920, 64
    %v1930 = vpop.permute.xlu0 %1929
    %1931 = vrot.lane.b32.xlu0 %v1921, 64
    %v1932 = vpop.permute.xlu0 %1931
    %1933 = vrot.lane.b32.xlu0 %v1922, 64
    %v1934 = vpop.permute.xlu0 %1933
    %v1939 = vadd.f32 %v1903, %v1928
    %v1940 = vadd.f32 %v1904, %v1930
    %v1941 = vadd.f32 %v1905, %v1932
    %v1942 = vadd.f32 %v1906, %v1934
    %v1943 = vld [vmem:[%s2 + $0x9] sm:$0x1]
    %v1944 = vlaneseq
    %v1945 = vshrl.u32 %v1944, 7
    %v1946 = vsub.s32 0, %v1945
    %v1947 = vrot.slane %v1943, %v1946
    %1949 = vrot.lane.b32.xlu0 %v1947, 64
    %v1950 = vpop.permute.xlu0 %1949
    %v1952 = vadd.f32 %v1939, %v1950
    %v1953 = vadd.f32 %v1940, %v1950
    %v1954 = vadd.f32 %v1941, %v1950
    %v1955 = vadd.f32 %v1942, %v1950
    %v1956 = vmul.f32 %v1952, 0.2
    %v1957 = vmul.f32 %v1953, 0.2
    %v1958 = vmul.f32 %v1954, 0.2
    %v1959 = vmul.f32 %v1955, 0.2
    %v1960 = vmax.f32 %v1952, %v1956
    %v1961 = vmax.f32 %v1953, %v1957
    %v1962 = vmax.f32 %v1954, %v1958
    %v1963 = vmax.f32 %v1955, %v1959
    %v1964 = vpack.c.bf16 %v1961, %v1960
    %v1965 = vpack.c.bf16 %v1963, %v1962
    %v1966 = vld [vmem:[#allocation2 + $0x208] sm:$0xff]
    %v1967 = vld [vmem:[#allocation2 + $0x210] sm:$0xff]
    %v1968 = vld [vmem:[#allocation2 + $0x218] sm:$0xff]
    %v1969 = vld [vmem:[#allocation2 + $0x220] sm:$0xff]
    %v1970 = vld [vmem:[#allocation2 + $0x228] sm:$0xff]
    %v1971 = vld [vmem:[#allocation2 + $0x230] sm:$0xff]
    %v1972 = vld [vmem:[#allocation2 + $0x238] sm:$0xff]
    %v1973 = vld [vmem:[#allocation2 + $0x240] sm:$0xff]
    %1976 = vrot.lane.b32.xlu0 %v1964, 64
    %v1977 = vpop.permute.xlu0 %1976
    %1978 = vrot.lane.b32.xlu0 %v1965, 64
    %v1979 = vpop.permute.xlu0 %1978
    %v1988 = vunpack.c.l.b16 %v1966
    %v1989 = vunpack.c.h.b16 %v1966
    %v1990 = vunpack.c.l.b16 %v1967
    %v1991 = vunpack.c.h.b16 %v1967
    %v1992 = vunpack.c.l.b16 %v1968
    %v1993 = vunpack.c.h.b16 %v1968
    %v1994 = vunpack.c.l.b16 %v1969
    %v1995 = vunpack.c.h.b16 %v1969
    %v1996 = vunpack.c.l.b16 %v1970
    %v1997 = vunpack.c.h.b16 %v1970
    %v1998 = vunpack.c.l.b16 %v1971
    %v1999 = vunpack.c.h.b16 %v1971
    %v2000 = vunpack.c.l.b16 %v1972
    %v2001 = vunpack.c.h.b16 %v1972
    %v2002 = vunpack.c.l.b16 %v1973
    %v2003 = vunpack.c.h.b16 %v1973
    %v2004 = vpack.c.b16 %v1990, %v1988
    %v2005 = vpack.c.b16 %v1991, %v1989
    %v2006 = vpack.c.b16 %v1994, %v1992
    %v2007 = vpack.c.b16 %v1995, %v1993
    %v2008 = vpack.c.b16 %v1998, %v1996
    %v2009 = vpack.c.b16 %v1999, %v1997
    %v2010 = vpack.c.b16 %v2002, %v2000
    %v2011 = vpack.c.b16 %v2003, %v2001
    %v2021 = vsel %vm1517, %v1977, 0
    %v2024 = vsel %vm1517, %v1979, 0
    %2026 = vmatprep.subr.bf16.mxu0 0
    %2027 = vmatpush1.bf16.msra.mxu0 0
    %2028 = vmatprep.subr.bf16.mxu0 0
    %2029 = vmatpush1.bf16.msra.mxu0 0
    %2030 = vmatprep.subr.bf16.mxu0 0
    %2031 = vmatpush1.bf16.msra.mxu0 0
    %2032 = vmatprep.subr.bf16.mxu0 0
    %2033 = vmatpush1.bf16.msra.mxu0 0
    %2034 = vmatprep.subr.bf16.mxu0 %v2011
    %2035 = vmatpush1.bf16.msra.mxu0 %v2010
    %2036 = vmatprep.subr.bf16.mxu0 %v2009
    %2037 = vmatpush1.bf16.msra.mxu0 %v2008
    %2038 = vmatprep.subr.bf16.mxu0 %v2007
    %2039 = vmatpush1.bf16.msra.mxu0 %v2006
    %2040 = vmatprep.subr.bf16.mxu0 %v2005
    %2041 = vmatpush1.bf16.msra.mxu0 %v2004
    %2042 = vmatprep.subr.bf16.mxu0 0
    %2043 = vmatpush2.bf16.msra.mxu0 0
    %2044 = vmatprep.subr.bf16.mxu0 0
    %2045 = vmatpush2.bf16.msra.mxu0 0
    %2046 = vmatprep.subr.bf16.mxu0 0
    %2047 = vmatpush2.bf16.msra.mxu0 0
    %2048 = vmatprep.subr.bf16.mxu0 0
    %2049 = vmatpush2.bf16.msra.mxu0 0
    %2050 = vmatprep.subr.bf16.mxu0 0
    %2051 = vmatpush2.bf16.msra.mxu0 0
    %2052 = vmatprep.subr.bf16.mxu0 0
    %2053 = vmatpush2.bf16.msra.mxu0 0
    %2054 = vmatprep.subr.bf16.mxu0 0
    %2055 = vmatpush2.bf16.msra.mxu0 0
    %2056 = vmatprep.subr.bf16.mxu0 0
    %2057 = vmatpush2.bf16.msra.mxu0 0
    %2058 = vmatprep.mubr.bf16.mxu0 0
    %2059 = vmatmul.mubr.bf16.gmra.mxu0 %v2021
    %v2060 = vpop.f32.mrf.mxu0
    %v2061 = vadd.f32 0.0, %v2060
    %v2062 = vpop.f32.mrf.mxu0
    %v2063 = vadd.f32 0.0, %v2062
    %v2064 = vpop.f32.mrf.mxu0
    %v2065 = vadd.f32 0.0, %v2064
    %v2066 = vpop.f32.mrf.mxu0
    %v2067 = vadd.f32 0.0, %v2066
    %2068 = vmatprep.mubr.bf16.mxu0 0
    %2069 = vmatmul.mubr.bf16.gmra.mxu0 %v2024
    %v2070 = vpop.f32.mrf.mxu0
    %v2071 = vadd.f32 0.0, %v2070
    %v2072 = vpop.f32.mrf.mxu0
    %v2073 = vadd.f32 0.0, %v2072
    %v2074 = vpop.f32.mrf.mxu0
    %v2075 = vadd.f32 0.0, %v2074
    %v2076 = vpop.f32.mrf.mxu0
    %v2077 = vadd.f32 0.0, %v2076
    %2078 = vdwg.mxu0
    %v2079 = vrot.slane %v2061, 7
    %v2080 = vrot.slane %v2065, 7
    %v2081 = vrot.slane %v2071, 7
    %v2082 = vrot.slane %v2075, 7
    %v2083 = vsel %vm1417, %v2081, %v2082
    %v2084 = vsel %vm1417, %v2080, %v2081
    %v2085 = vsel %vm1417, %v2079, %v2080
    %v2086 = vsel %vm1417, %v2082, %v2079
    %v2087 = vsel %vm1871, %v2086, 0.0
    %v2088 = vsel %vm1872, %v2085, 0.0
    %v2089 = vsel %vm1873, %v2084, 0.0
    %v2090 = vsel %vm1874, %v2083, 0.0
    %2095 = vrot.lane.b32.xlu0 %v2087, 64
    %v2096 = vpop.permute.xlu0 %2095
    %2097 = vrot.lane.b32.xlu0 %v2088, 64
    %v2098 = vpop.permute.xlu0 %2097
    %2099 = vrot.lane.b32.xlu0 %v2089, 64
    %v2100 = vpop.permute.xlu0 %2099
    %2101 = vrot.lane.b32.xlu0 %v2090, 64
    %v2102 = vpop.permute.xlu0 %2101
    %v2107 = vadd.f32 %v2061, %v2096
    %v2108 = vadd.f32 %v2065, %v2098
    %v2109 = vadd.f32 %v2071, %v2100
    %v2110 = vadd.f32 %v2075, %v2102
    %v2111 = vrot.slane %v2063, 1
    %v2112 = vrot.slane %v2067, 1
    %v2113 = vrot.slane %v2073, 1
    %v2114 = vrot.slane %v2077, 1
    %v2115 = vsel %vm234, %v2113, %v2114
    %v2116 = vsel %vm234, %v2112, %v2113
    %v2117 = vsel %vm234, %v2111, %v2112
    %v2118 = vsel %vm234, %v2114, %v2111
    %v2119 = vsel %vm1907, %v2117, 0.0
    %v2120 = vsel %vm1908, %v2116, 0.0
    %v2121 = vsel %vm1909, %v2115, 0.0
    %v2122 = vsel %vm1910, %v2118, 0.0
    %2127 = vrot.lane.b32.xlu0 %v2119, 64
    %v2128 = vpop.permute.xlu0 %2127
    %2129 = vrot.lane.b32.xlu0 %v2120, 64
    %v2130 = vpop.permute.xlu0 %2129
    %2131 = vrot.lane.b32.xlu0 %v2121, 64
    %v2132 = vpop.permute.xlu0 %2131
    %2133 = vrot.lane.b32.xlu0 %v2122, 64
    %v2134 = vpop.permute.xlu0 %2133
    %v2139 = vadd.f32 %v2107, %v2128
    %v2140 = vadd.f32 %v2108, %v2130
    %v2141 = vadd.f32 %v2109, %v2132
    %v2142 = vadd.f32 %v2110, %v2134
    %v2143 = vld [vmem:[%s2 + $0xa] sm:$0x1]
    %v2144 = vlaneseq
    %v2145 = vshrl.u32 %v2144, 7
    %v2146 = vsub.s32 0, %v2145
    %v2147 = vrot.slane %v2143, %v2146
    %2149 = vrot.lane.b32.xlu0 %v2147, 64
    %v2150 = vpop.permute.xlu0 %2149
    %v2152 = vadd.f32 %v2139, %v2150
    %v2153 = vadd.f32 %v2140, %v2150
    %v2154 = vadd.f32 %v2141, %v2150
    %v2155 = vadd.f32 %v2142, %v2150
    %v2156 = vmul.f32 %v2152, 0.2
    %v2157 = vmul.f32 %v2153, 0.2
    %v2158 = vmul.f32 %v2154, 0.2
    %v2159 = vmul.f32 %v2155, 0.2
    %v2160 = vmax.f32 %v2152, %v2156
    %v2161 = vmax.f32 %v2153, %v2157
    %v2162 = vmax.f32 %v2154, %v2158
    %v2163 = vmax.f32 %v2155, %v2159
    %v2164 = vpack.c.bf16 %v2161, %v2160
    %v2165 = vpack.c.bf16 %v2163, %v2162
    %v2166 = vld [vmem:[#allocation2 + $0x248] sm:$0xf]
    %v2167 = vld [vmem:[#allocation2 + $0x250] sm:$0xf]
    %v2168 = vld [vmem:[#allocation2 + $0x258] sm:$0xf]
    %v2169 = vld [vmem:[#allocation2 + $0x260] sm:$0xf]
    %v2170 = vld [vmem:[#allocation2 + $0x268] sm:$0xf]
    %v2171 = vld [vmem:[#allocation2 + $0x270] sm:$0xf]
    %v2172 = vld [vmem:[#allocation2 + $0x278] sm:$0xf]
    %v2173 = vld [vmem:[#allocation2 + $0x280] sm:$0xf]
    %2176 = vrot.lane.b32.xlu0 %v2164, 64
    %v2177 = vpop.permute.xlu0 %2176
    %2178 = vrot.lane.b32.xlu0 %v2165, 64
    %v2179 = vpop.permute.xlu0 %2178
    %v2188 = vunpack.c.l.b16 %v2166
    %v2189 = vunpack.c.l.b16 %v2167
    %v2190 = vunpack.c.l.b16 %v2168
    %v2191 = vunpack.c.l.b16 %v2169
    %v2192 = vunpack.c.l.b16 %v2170
    %v2193 = vunpack.c.l.b16 %v2171
    %v2194 = vunpack.c.l.b16 %v2172
    %v2195 = vunpack.c.l.b16 %v2173
    %v2196 = vpack.c.b16 %v2189, %v2188
    %v2197 = vpack.c.b16 %v2191, %v2190
    %v2198 = vpack.c.b16 %v2193, %v2192
    %v2199 = vpack.c.b16 %v2195, %v2194
    %v2205 = vsel %vm1517, %v2177, 0
    %v2208 = vsel %vm1517, %v2179, 0
    %2210 = vmatprep.subr.bf16.mxu0 0
    %2211 = vmatpush1.bf16.msra.mxu0 0
    %2212 = vmatprep.subr.bf16.mxu0 0
    %2213 = vmatpush1.bf16.msra.mxu0 0
    %2214 = vmatprep.subr.bf16.mxu0 0
    %2215 = vmatpush1.bf16.msra.mxu0 0
    %2216 = vmatprep.subr.bf16.mxu0 0
    %2217 = vmatpush1.bf16.msra.mxu0 0
    %2218 = vmatprep.subr.bf16.mxu0 0
    %2219 = vmatpush1.bf16.msra.mxu0 %v2199
    %2220 = vmatprep.subr.bf16.mxu0 0
    %2221 = vmatpush1.bf16.msra.mxu0 %v2198
    %2222 = vmatprep.subr.bf16.mxu0 0
    %2223 = vmatpush1.bf16.msra.mxu0 %v2197
    %2224 = vmatprep.subr.bf16.mxu0 0
    %2225 = vmatpush1.bf16.msra.mxu0 %v2196
    %2226 = vmatprep.subr.bf16.mxu0 0
    %2227 = vmatpush2.bf16.msra.mxu0 0
    %2228 = vmatprep.subr.bf16.mxu0 0
    %2229 = vmatpush2.bf16.msra.mxu0 0
    %2230 = vmatprep.subr.bf16.mxu0 0
    %2231 = vmatpush2.bf16.msra.mxu0 0
    %2232 = vmatprep.subr.bf16.mxu0 0
    %2233 = vmatpush2.bf16.msra.mxu0 0
    %2234 = vmatprep.subr.bf16.mxu0 0
    %2235 = vmatpush2.bf16.msra.mxu0 0
    %2236 = vmatprep.subr.bf16.mxu0 0
    %2237 = vmatpush2.bf16.msra.mxu0 0
    %2238 = vmatprep.subr.bf16.mxu0 0
    %2239 = vmatpush2.bf16.msra.mxu0 0
    %2240 = vmatprep.subr.bf16.mxu0 0
    %2241 = vmatpush2.bf16.msra.mxu0 0
    %2242 = vmatprep.mubr.bf16.mxu0 0
    %2243 = vmatmul.mubr.bf16.gmra.mxu0 %v2205
    %v2244 = vpop.f32.mrf.mxu0
    %v2245 = vadd.f32 0.0, %v2244
    %v2246 = vpop.f32.mrf.mxu0
    %v2247 = vpop.f32.mrf.mxu0
    %v2248 = vadd.f32 0.0, %v2247
    %v2249 = vpop.f32.mrf.mxu0
    %2250 = vmatprep.mubr.bf16.mxu0 0
    %2251 = vmatmul.mubr.bf16.gmra.mxu0 %v2208
    %v2252 = vpop.f32.mrf.mxu0
    %v2253 = vadd.f32 0.0, %v2252
    %v2254 = vpop.f32.mrf.mxu0
    %v2255 = vpop.f32.mrf.mxu0
    %v2256 = vadd.f32 0.0, %v2255
    %v2257 = vpop.f32.mrf.mxu0
    %2258 = vdwg.mxu0
    %v2259 = vrot.slane %v2245, 7
    %v2260 = vrot.slane %v2248, 7
    %v2261 = vrot.slane %v2253, 7
    %v2262 = vrot.slane %v2256, 7
    %v2263 = vsel %vm1417, %v2261, %v2262
    %v2264 = vsel %vm1417, %v2260, %v2261
    %v2265 = vsel %vm1417, %v2259, %v2260
    %v2266 = vsel %vm1417, %v2262, %v2259
    %v2267 = vsel %vm1871, %v2266, 0.0
    %v2268 = vsel %vm1872, %v2265, 0.0
    %v2269 = vsel %vm1873, %v2264, 0.0
    %v2270 = vsel %vm1874, %v2263, 0.0
    %2275 = vrot.lane.b32.xlu0 %v2267, 32
    %v2276 = vpop.permute.xlu0 %2275
    %2277 = vrot.lane.b32.xlu0 %v2268, 32
    %v2278 = vpop.permute.xlu0 %2277
    %2279 = vrot.lane.b32.xlu0 %v2269, 32
    %v2280 = vpop.permute.xlu0 %2279
    %2281 = vrot.lane.b32.xlu0 %v2270, 32
    %v2282 = vpop.permute.xlu0 %2281
    %v2287 = vadd.f32 %v2245, %v2276
    %v2288 = vadd.f32 %v2248, %v2278
    %v2289 = vadd.f32 %v2253, %v2280
    %v2290 = vadd.f32 %v2256, %v2282
    %2295 = vrot.lane.b32.xlu0 %v2245, 64
    %v2296 = vpop.permute.xlu0 %2295
    %2297 = vrot.lane.b32.xlu0 %v2248, 64
    %v2298 = vpop.permute.xlu0 %2297
    %2299 = vrot.lane.b32.xlu0 %v2253, 64
    %v2300 = vpop.permute.xlu0 %2299
    %2301 = vrot.lane.b32.xlu0 %v2256, 64
    %v2302 = vpop.permute.xlu0 %2301
    %v2307 = vrot.slane %v2296, 1
    %v2308 = vrot.slane %v2298, 1
    %v2309 = vrot.slane %v2300, 1
    %v2310 = vrot.slane %v2302, 1
    %v2311 = vsel %vm234, %v2309, %v2310
    %v2312 = vsel %vm234, %v2308, %v2309
    %v2313 = vsel %vm234, %v2307, %v2308
    %v2314 = vsel %vm234, %v2310, %v2307
    %v2315 = vsel %vm1907, %v2313, 0.0
    %v2316 = vsel %vm1908, %v2312, 0.0
    %v2317 = vsel %vm1909, %v2311, 0.0
    %v2318 = vsel %vm1910, %v2314, 0.0
    %2323 = vrot.lane.b32.xlu0 %v2315, 32
    %v2324 = vpop.permute.xlu0 %2323
    %2325 = vrot.lane.b32.xlu0 %v2316, 32
    %v2326 = vpop.permute.xlu0 %2325
    %2327 = vrot.lane.b32.xlu0 %v2317, 32
    %v2328 = vpop.permute.xlu0 %2327
    %2329 = vrot.lane.b32.xlu0 %v2318, 32
    %v2330 = vpop.permute.xlu0 %2329
    %v2335 = vadd.f32 %v2287, %v2324
    %v2336 = vadd.f32 %v2288, %v2326
    %v2337 = vadd.f32 %v2289, %v2328
    %v2338 = vadd.f32 %v2290, %v2330
    %v2339 = vld [vmem:[%s2 + $0xb] sm:$0x1]
    %v2340 = vlaneseq
    %v2341 = vshrl.u32 %v2340, 7
    %v2342 = vsub.s32 0, %v2341
    %v2343 = vrot.slane %v2339, %v2342
    %2345 = vrot.lane.b32.xlu0 %v2343, 32
    %v2346 = vpop.permute.xlu0 %2345
    %v2348 = vadd.f32 %v2335, %v2346
    %v2349 = vadd.f32 %v2336, %v2346
    %v2350 = vadd.f32 %v2337, %v2346
    %v2351 = vadd.f32 %v2338, %v2346
    %2356 = vrot.lane.b32.xlu0 %v2348, 96
    %v2357 = vpop.permute.xlu0 %2356
    %2358 = vrot.lane.b32.xlu0 %v2349, 96
    %v2359 = vpop.permute.xlu0 %2358
    %2360 = vrot.lane.b32.xlu0 %v2350, 96
    %v2361 = vpop.permute.xlu0 %2360
    %2362 = vrot.lane.b32.xlu0 %v2351, 96
    %v2363 = vpop.permute.xlu0 %2362
    %2368 = vst.msk [vmem:[%s3] sm:$0xff] %vm59, %v2357
    %2369 = vst.msk [vmem:[%s3 + $0x8] sm:$0xff] %vm59, %v2359
    %2370 = vst.msk [vmem:[%s3 + $0x10] sm:$0xff] %vm59, %v2361
    %2371 = vst.msk [vmem:[%s3 + $0x18] sm:$0xff] %vm59, %v2363
    // Predicated region
    $region18: #{forward.1} parent=1 // pred_check
      _
    $region19: #{forward.1} parent=1 // pred_check_branch
      %2373 = sbr.rel (0) target = $region21
    $region20: #{forward.1} parent=1 // pred_region
      _
    $region21: #{forward.1} parent=1 // pred_fallthru
      _
    // Predicated region
    $region22: #{forward.1} parent=1 // pred_check
      _
    $region23: #{forward.1} parent=1 // pred_check_branch
      %2375 = sbr.rel (0) target = $region25
    $region24: #{forward.1} parent=1 // pred_region
      _
    $region25: #{forward.1} parent=1 // pred_fallthru
      _
    %2376 = vsyncpa [#allocation3], 1

</llo_original>
